<compile_context>
chip_gen: v6e
topology: v6e:2x2x1
jax: 0.10.0
libtpu: 0.0.40
codegen_flags: <defaults>
</compile_context>

<pallas_src>
import functools

import jax
import jax.numpy as jnp
from jax.experimental import pallas as pl
from jax.experimental.pallas import tpu as pltpu


def _round_up(n, m):
    return ((n + m - 1) // m) * m


# ----------------------------------------------------------------------------
# Fused Pallas kernel: full VAE forward for one batch tile
# ----------------------------------------------------------------------------
def _vae_fused_kernel(
    x_ref, eps_ref,
    w1_ref, b1_ref, w2_ref, b2_ref,        # encoder
    w3_ref, b3_ref, w4_ref, b4_ref,        # decoder
    xhat_ref, stats_ref,
    *, latent_pad,
):
    f32 = jnp.float32
    bf16 = jnp.bfloat16
    Lp = latent_pad

    # ---- encoder layer 1: (TM, D)bf16 @ (D, Hp)bf16 -> f32 acc, bias+ReLU in f32
    h = jnp.dot(x_ref[...], w1_ref[...], preferred_element_type=f32)
    h = jnp.maximum(h + b1_ref[...], 0.0)

    # ---- encoder layer 2: (TM, Hp) @ (Hp, 2*Lp) -----------------------------
    enc = jnp.dot(h.astype(bf16), w2_ref[...], preferred_element_type=f32)
    enc = enc + b2_ref[...]

    # mu / log_var split at a 128-lane boundary (free vreg selection)
    mu = enc[:, :Lp]
    log_var = enc[:, Lp:]

    # ---- reparameterize (f32 on VPU/EUP) -------------------------------------
    std = jnp.exp(log_var * 0.5)
    z = mu + eps_ref[...] * std

    # ---- decoder layer 1: (TM, Lp) @ (Lp, Hp), bias + ReLU --------------------
    h2 = jnp.dot(z.astype(bf16), w3_ref[...], preferred_element_type=f32)
    h2 = jnp.maximum(h2 + b3_ref[...], 0.0)

    # ---- decoder layer 2: (TM, Hp) @ (Hp, D), bias ----------------------------
    xh = jnp.dot(h2.astype(bf16), w4_ref[...], preferred_element_type=f32)
    xh = xh + b4_ref[...]

    xhat_ref[...] = xh.astype(xhat_ref.dtype)

    # four direct 128-lane-aligned stores (no concat temporary)
    sdt = stats_ref.dtype
    stats_ref[:, 0 * Lp:1 * Lp] = mu.astype(sdt)
    stats_ref[:, 1 * Lp:2 * Lp] = log_var.astype(sdt)
    stats_ref[:, 2 * Lp:3 * Lp] = z.astype(sdt)
    stats_ref[:, 3 * Lp:4 * Lp] = std.astype(sdt)


# ----------------------------------------------------------------------------
# Host wrapper
# ----------------------------------------------------------------------------
def vae_forward(kparams, x_nchw, eps, *, latent, latent_pad, hidden_pad,
                input_shape, tm=256, vmem_limit_bytes=None):
    """Returns (x_hat, z, mu, log_var, std) — same as VAE.forward."""
    B = x_nchw.shape[0]
    C, H, W = input_shape
    D = C * H * W
    Lp, Hp = latent_pad, hidden_pad

    # Batch tile: default 256 (fills MXU rows on v5e/v6e/v7x at real batch
    # sizes), but never larger than the sublane-rounded batch so tiny batches
    # don't compute padded garbage rows.
    tm_eff = max(8, min(tm, _round_up(B, 8)))
    Bp = _round_up(B, tm_eff)

    # x goes to the kernel as bf16 (largest input DMA); pad only if ragged.
    x_flat = x_nchw.reshape(B, D).astype(jnp.bfloat16)
    if Bp != B:
        x_in = jnp.zeros((Bp, D), jnp.bfloat16).at[:B].set(x_flat)
    else:
        x_in = x_flat
    # eps needs lane padding latent -> Lp regardless (tiny)
    eps_in = jnp.zeros((Bp, Lp), jnp.float32).at[:B, :latent].set(eps)

    if vmem_limit_bytes is None:
        # double-buffered batch tiles (x/eps in, x_hat/stats out) + single-buffered weights
        tile_io = 2 * (tm_eff * D * 2 + tm_eff * Lp * 4
                       + tm_eff * D * 2 + tm_eff * 4 * Lp * 4)
        weights = ((D * Hp + Hp * 2 * Lp + Lp * Hp + Hp * D) * 2
                   + (Hp + 2 * Lp + Hp + D) * 4)
        vmem_limit_bytes = min(max(32 << 20, int(1.5 * (tile_io + weights))),
                               96 << 20)

    kern = functools.partial(_vae_fused_kernel, latent_pad=Lp)

    # weights/biases: constant block index -> single-buffer (no re-DMA, less VMEM)
    def wspec(shape):
        return pl.BlockSpec(shape, lambda i: (0, 0),
                            pipeline_mode=pl.Buffered(1))

    xhat_pad, stats = pl.pallas_call(
        kern,
        out_shape=(
            jax.ShapeDtypeStruct((Bp, D), jnp.bfloat16),
            jax.ShapeDtypeStruct((Bp, 4 * Lp), jnp.float32),
        ),
        grid_spec=pltpu.PrefetchScalarGridSpec(
            num_scalar_prefetch=0,
            grid=(Bp // tm_eff,),
            in_specs=[
                pl.BlockSpec((tm_eff, D), lambda i: (i, 0)),    # x tile (bf16)
                pl.BlockSpec((tm_eff, Lp), lambda i: (i, 0)),   # eps tile (f32)
                wspec((D, Hp)),          # enc_w1 (bf16)
                wspec((1, Hp)),          # enc_b1 (f32)
                wspec((Hp, 2 * Lp)),     # enc_w2 (bf16)
                wspec((1, 2 * Lp)),      # enc_b2 (f32)
                wspec((Lp, Hp)),         # dec_w1 (bf16)
                wspec((1, Hp)),          # dec_b1 (f32)
                wspec((Hp, D)),          # dec_w2 (bf16)
                wspec((1, D)),           # dec_b2 (f32)
            ],
            out_specs=(
                pl.BlockSpec((tm_eff, D), lambda i: (i, 0)),        # x_hat (bf16)
                pl.BlockSpec((tm_eff, 4 * Lp), lambda i: (i, 0)),   # packed stats
            ),
        ),
        compiler_params=pltpu.CompilerParams(
            dimension_semantics=("parallel",),
            vmem_limit_bytes=vmem_limit_bytes,
        ),
    )(
        x_in, eps_in,
        kparams["enc_w1"], kparams["enc_b1"], kparams["enc_w2"], kparams["enc_b2"],
        kparams["dec_w1"], kparams["dec_b1"], kparams["dec_w2"], kparams["dec_b2"],
    )

    x_hat = xhat_pad[:B].astype(jnp.float32).reshape(B, C, H, W)
    mu = stats[:B, 0 * Lp:0 * Lp + latent]
    log_var = stats[:B, 1 * Lp:1 * Lp + latent]
    z = stats[:B, 2 * Lp:2 * Lp + latent]
    std = stats[:B, 3 * Lp:3 * Lp + latent]

    # TODO(synk): encoder/decoder activation-regularization accumulators
    # (activations_total) are training-time side state, not forward outputs.
    return x_hat, z, mu, log_var, std


# ----------------------------------------------------------------------------
# Deterministic synthetic parameters (no checkpoint)
# ----------------------------------------------------------------------------
def make_params(key, input_shape, latent_size, hidden):
    C, H, W = input_shape
    D = C * H * W
    ks = jax.random.split(key, 8)

    def lin_init(kw, kb, fan_in, fan_out):
        scale = 1.0 / jnp.sqrt(jnp.float32(fan_in))
        w = jax.random.uniform(kw, (fan_in, fan_out), jnp.float32, -scale, scale)
        b = jax.random.uniform(kb, (1, fan_out), jnp.float32, -scale, scale)
        return w, b

    p = {}
    p["enc_w1"], p["enc_b1"] = lin_init(ks[0], ks[1], D, hidden)
    p["enc_w2"], p["enc_b2"] = lin_init(ks[2], ks[3], hidden, 2 * latent_size)
    p["dec_w1"], p["dec_b1"] = lin_init(ks[4], ks[5], latent_size, hidden)
    p["dec_w2"], p["dec_b2"] = lin_init(ks[6], ks[7], hidden, D)
    return p


def pad_params_for_kernel(params, *, latent, latent_pad, hidden, hidden_pad,
                          input_shape):
    """Zero-pad to lane-dense (128-multiple) widths; cast weights to bf16.

    enc_w2 columns: [0:Lp] -> mu block (first `latent` real), [Lp:2Lp] ->
    log_var block.  Zero padding is mathematically exact.
    """
    C, H, W = input_shape
    D = C * H * W
    Lp, Hp = latent_pad, hidden_pad
    f32, bf16 = jnp.float32, jnp.bfloat16

    kp = {}
    kp["enc_w1"] = (jnp.zeros((D, Hp), f32)
                    .at[:, :hidden].set(params["enc_w1"])).astype(bf16)
    kp["enc_b1"] = jnp.zeros((1, Hp), f32).at[:, :hidden].set(params["enc_b1"])

    w2 = jnp.zeros((Hp, 2 * Lp), f32)
    w2 = w2.at[:hidden, 0:latent].set(params["enc_w2"][:, 0:latent])
    w2 = w2.at[:hidden, Lp:Lp + latent].set(params["enc_w2"][:, latent:2 * latent])
    kp["enc_w2"] = w2.astype(bf16)
    b2 = jnp.zeros((1, 2 * Lp), f32)
    b2 = b2.at[:, 0:latent].set(params["enc_b2"][:, 0:latent])
    b2 = b2.at[:, Lp:Lp + latent].set(params["enc_b2"][:, latent:2 * latent])
    kp["enc_b2"] = b2

    kp["dec_w1"] = (jnp.zeros((Lp, Hp), f32)
                    .at[:latent, :hidden].set(params["dec_w1"])).astype(bf16)
    kp["dec_b1"] = jnp.zeros((1, Hp), f32).at[:, :hidden].set(params["dec_b1"])
    kp["dec_w2"] = (jnp.zeros((Hp, D), f32)
                    .at[:hidden, :].set(params["dec_w2"])).astype(bf16)
    kp["dec_b2"] = params["dec_b2"].astype(f32)
    return kp


# ----------------------------------------------------------------------------
# Pure-JAX reference (same bf16 MXU-operand casting as the kernel)
# ----------------------------------------------------------------------------
def vae_reference(params, x_nchw, eps, *, latent, input_shape):
    B = x_nchw.shape[0]
    C, H, W = input_shape
    bf16, f32 = jnp.bfloat16, jnp.float32
    x = x_nchw.reshape(B, -1)
    h = jnp.maximum(
        jnp.dot(x.astype(bf16), params["enc_w1"].astype(bf16),
                preferred_element_type=f32) + params["enc_b1"], 0.0)
    enc = jnp.dot(h.astype(bf16), params["enc_w2"].astype(bf16),
                  preferred_element_type=f32) + params["enc_b2"]
    mu, log_var = enc[:, :latent], enc[:, latent:]
    std = jnp.exp(log_var * 0.5)
    z = mu + eps * std
    h2 = jnp.maximum(
        jnp.dot(z.astype(bf16), params["dec_w1"].astype(bf16),
                preferred_element_type=f32) + params["dec_b1"], 0.0)
    xh = jnp.dot(h2.astype(bf16), params["dec_w2"].astype(bf16),
                 preferred_element_type=f32) + params["dec_b2"]
    return xh.reshape(B, C, H, W), z, mu, log_var, std


# ----------------------------------------------------------------------------
if __name__ == "__main__":
    input_shape = (4, 16, 16)       # (C, H, W) -> D = 1024 (lane-dense already)
    latent_size = 8
    hidden = 32
    batch = 2

    LATENT_PAD = 128                # lane-dense latent block
    HIDDEN_PAD = 128                # lane-dense hidden block

    key = jax.random.PRNGKey(0)
    k_params, k_x, k_eps = jax.random.split(key, 3)

    params = make_params(k_params, input_shape, latent_size, hidden)
    kparams = pad_params_for_kernel(
        params, latent=latent_size, latent_pad=LATENT_PAD,
        hidden=hidden, hidden_pad=HIDDEN_PAD, input_shape=input_shape)

    x = jax.random.normal(k_x, (batch,) + input_shape, jnp.float32)
    eps = jax.random.normal(k_eps, (batch, latent_size), jnp.float32)

    fwd = jax.jit(functools.partial(
        vae_forward, latent=latent_size, latent_pad=LATENT_PAD,
        hidden_pad=HIDDEN_PAD, input_shape=input_shape))
    outs = fwd(kparams, x, eps)
    jax.block_until_ready(outs)
    x_hat, z, mu, log_var, std = outs

    assert x_hat.shape == (batch,) + input_shape
    assert z.shape == (batch, latent_size)
    assert mu.shape == (batch, latent_size)
    assert log_var.shape == (batch, latent_size)
    assert std.shape == (batch, latent_size)

    # correctness vs pure-JAX reference (same bf16 operand casting; x_hat goes
    # through a bf16 HBM store so tolerance covers the extra output rounding)
    x_hat_r, z_r, mu_r, log_var_r, std_r = vae_reference(
        params, x, eps, latent=latent_size, input_shape=input_shape)
    for a, b in [(x_hat, x_hat_r), (z, z_r), (mu, mu_r),
                 (log_var, log_var_r), (std, std_r)]:
        assert jnp.all(jnp.isfinite(a))
        assert jnp.allclose(a, b, atol=2e-2, rtol=2e-2)

    print("KERNEL_OK")
</pallas_src>

<mosaic_0001>
module attributes {stable_mosaic.version = 11 : i64} {
  func.func @_vae_fused_kernel(%arg0: i32, %arg1: memref<8x1024xbf16, #tpu.memory_space<vmem>>, %arg2: memref<8x128xf32, #tpu.memory_space<vmem>>, %arg3: memref<1024x128xbf16, #tpu.memory_space<vmem>>, %arg4: memref<1x128xf32, #tpu.memory_space<vmem>>, %arg5: memref<128x256xbf16, #tpu.memory_space<vmem>>, %arg6: memref<1x256xf32, #tpu.memory_space<vmem>>, %arg7: memref<128x128xbf16, #tpu.memory_space<vmem>>, %arg8: memref<1x128xf32, #tpu.memory_space<vmem>>, %arg9: memref<128x1024xbf16, #tpu.memory_space<vmem>>, %arg10: memref<1x1024xf32, #tpu.memory_space<vmem>>, %arg11: memref<8x1024xbf16, #tpu.memory_space<vmem>>, %arg12: memref<8x512xf32, #tpu.memory_space<vmem>>) attributes {dimension_semantics = [#tpu.dimension_semantics<parallel>], iteration_bounds = array<i64: 1>, scalar_prefetch = 0 : i64, scratch_operands = 0 : i64, tpu.core_type = #tpu.core_type<tc>, window_params = [{transform_indices = @transform_0, window_bounds = array<i64: 8, 1024>}, {transform_indices = @transform_1, window_bounds = array<i64: 8, 128>}, {pipeline_mode = #tpu.pipeline_mode<synchronous>, transform_indices = @transform_2, window_bounds = array<i64: 1024, 128>}, {pipeline_mode = #tpu.pipeline_mode<synchronous>, transform_indices = @transform_3, window_bounds = array<i64: 1, 128>}, {pipeline_mode = #tpu.pipeline_mode<synchronous>, transform_indices = @transform_4, window_bounds = array<i64: 128, 256>}, {pipeline_mode = #tpu.pipeline_mode<synchronous>, transform_indices = @transform_5, window_bounds = array<i64: 1, 256>}, {pipeline_mode = #tpu.pipeline_mode<synchronous>, transform_indices = @transform_6, window_bounds = array<i64: 128, 128>}, {pipeline_mode = #tpu.pipeline_mode<synchronous>, transform_indices = @transform_7, window_bounds = array<i64: 1, 128>}, {pipeline_mode = #tpu.pipeline_mode<synchronous>, transform_indices = @transform_8, window_bounds = array<i64: 128, 1024>}, {pipeline_mode = #tpu.pipeline_mode<synchronous>, transform_indices = @transform_9, window_bounds = array<i64: 1, 1024>}, {transform_indices = @transform_10, window_bounds = array<i64: 8, 1024>}, {transform_indices = @transform_11, window_bounds = array<i64: 8, 512>}]} {
    %c0 = arith.constant 0 : index
    %c0_0 = arith.constant 0 : index
    %0 = vector.load %arg1[%c0, %c0_0] : memref<8x1024xbf16, #tpu.memory_space<vmem>>, vector<8x1024xbf16>
    %c0_1 = arith.constant 0 : index
    %c0_2 = arith.constant 0 : index
    %1 = vector.load %arg3[%c0_1, %c0_2] : memref<1024x128xbf16, #tpu.memory_space<vmem>>, vector<1024x128xbf16>
    %cst = arith.constant dense<0.000000e+00> : vector<8x128xf32>
    %2 = tpu.matmul %0, %1, %cst {dimension_numbers = #tpu.dot_dimension_numbers<[1], [0], [0], [1], [0, 0, 1, 1], [], []>} : vector<8x1024xbf16>, vector<1024x128xbf16>, vector<8x128xf32> -> vector<8x128xf32>
    %c0_3 = arith.constant 0 : index
    %c0_4 = arith.constant 0 : index
    %3 = vector.load %arg4[%c0_3, %c0_4] : memref<1x128xf32, #tpu.memory_space<vmem>>, vector<1x128xf32>
    %4 = vector.broadcast %3 : vector<1x128xf32> to vector<8x128xf32>
    %5 = arith.addf %2, %4 : vector<8x128xf32>
    %cst_5 = arith.constant 0.000000e+00 : f32
    %6 = vector.broadcast %cst_5 : f32 to vector<8x128xf32>
    %7 = arith.maximumf %5, %6 : vector<8x128xf32>
    %8 = arith.truncf %7 : vector<8x128xf32> to vector<8x128xbf16>
    %c0_6 = arith.constant 0 : index
    %c0_7 = arith.constant 0 : index
    %9 = vector.load %arg5[%c0_6, %c0_7] : memref<128x256xbf16, #tpu.memory_space<vmem>>, vector<128x256xbf16>
    %cst_8 = arith.constant dense<0.000000e+00> : vector<8x256xf32>
    %10 = tpu.matmul %8, %9, %cst_8 {dimension_numbers = #tpu.dot_dimension_numbers<[1], [0], [0], [1], [0, 0, 1, 1], [], []>} : vector<8x128xbf16>, vector<128x256xbf16>, vector<8x256xf32> -> vector<8x256xf32>
    %c0_9 = arith.constant 0 : index
    %c0_10 = arith.constant 0 : index
    %11 = vector.load %arg6[%c0_9, %c0_10] : memref<1x256xf32, #tpu.memory_space<vmem>>, vector<1x256xf32>
    %12 = vector.broadcast %11 : vector<1x256xf32> to vector<8x256xf32>
    %13 = arith.addf %10, %12 : vector<8x256xf32>
    %14 = vector.extract_strided_slice %13 {offsets = [0, 0], sizes = [8, 128], strides = [1, 1]} : vector<8x256xf32> to vector<8x128xf32>
    %15 = vector.extract_strided_slice %13 {offsets = [0, 128], sizes = [8, 128], strides = [1, 1]} : vector<8x256xf32> to vector<8x128xf32>
    %cst_11 = arith.constant 5.000000e-01 : f32
    %16 = vector.broadcast %cst_11 : f32 to vector<8x128xf32>
    %17 = arith.mulf %15, %16 : vector<8x128xf32>
    %18 = math.exp %17 : vector<8x128xf32>
    %c0_12 = arith.constant 0 : index
    %c0_13 = arith.constant 0 : index
    %19 = vector.load %arg2[%c0_12, %c0_13] : memref<8x128xf32, #tpu.memory_space<vmem>>, vector<8x128xf32>
    %20 = arith.mulf %19, %18 : vector<8x128xf32>
    %21 = arith.addf %14, %20 : vector<8x128xf32>
    %22 = arith.truncf %21 : vector<8x128xf32> to vector<8x128xbf16>
    %c0_14 = arith.constant 0 : index
    %c0_15 = arith.constant 0 : index
    %23 = vector.load %arg7[%c0_14, %c0_15] : memref<128x128xbf16, #tpu.memory_space<vmem>>, vector<128x128xbf16>
    %cst_16 = arith.constant dense<0.000000e+00> : vector<8x128xf32>
    %24 = tpu.matmul %22, %23, %cst_16 {dimension_numbers = #tpu.dot_dimension_numbers<[1], [0], [0], [1], [0, 0, 1, 1], [], []>} : vector<8x128xbf16>, vector<128x128xbf16>, vector<8x128xf32> -> vector<8x128xf32>
    %c0_17 = arith.constant 0 : index
    %c0_18 = arith.constant 0 : index
    %25 = vector.load %arg8[%c0_17, %c0_18] : memref<1x128xf32, #tpu.memory_space<vmem>>, vector<1x128xf32>
    %26 = vector.broadcast %25 : vector<1x128xf32> to vector<8x128xf32>
    %27 = arith.addf %24, %26 : vector<8x128xf32>
    %cst_19 = arith.constant 0.000000e+00 : f32
    %28 = vector.broadcast %cst_19 : f32 to vector<8x128xf32>
    %29 = arith.maximumf %27, %28 : vector<8x128xf32>
    %30 = arith.truncf %29 : vector<8x128xf32> to vector<8x128xbf16>
    %c0_20 = arith.constant 0 : index
    %c0_21 = arith.constant 0 : index
    %31 = vector.load %arg9[%c0_20, %c0_21] : memref<128x1024xbf16, #tpu.memory_space<vmem>>, vector<128x1024xbf16>
    %cst_22 = arith.constant dense<0.000000e+00> : vector<8x1024xf32>
    %32 = tpu.matmul %30, %31, %cst_22 {dimension_numbers = #tpu.dot_dimension_numbers<[1], [0], [0], [1], [0, 0, 1, 1], [], []>} : vector<8x128xbf16>, vector<128x1024xbf16>, vector<8x1024xf32> -> vector<8x1024xf32>
    %c0_23 = arith.constant 0 : index
    %c0_24 = arith.constant 0 : index
    %33 = vector.load %arg10[%c0_23, %c0_24] : memref<1x1024xf32, #tpu.memory_space<vmem>>, vector<1x1024xf32>
    %34 = vector.broadcast %33 : vector<1x1024xf32> to vector<8x1024xf32>
    %35 = arith.addf %32, %34 : vector<8x1024xf32>
    %36 = arith.truncf %35 : vector<8x1024xf32> to vector<8x1024xbf16>
    %c0_25 = arith.constant 0 : index
    %c0_26 = arith.constant 0 : index
    %37 = vector.load %arg11[%c0_25, %c0_26] : memref<8x1024xbf16, #tpu.memory_space<vmem>>, vector<8x1024xbf16>
    tpu.vector_store %arg11[%c0_25, %c0_26], %36 {strides = array<i32>} : memref<8x1024xbf16, #tpu.memory_space<vmem>>, vector<8x1024xbf16>,
    %c0_27 = arith.constant 0 : index
    %c0_28 = arith.constant 0 : index
    %38 = vector.load %arg12[%c0_27, %c0_28] : memref<8x512xf32, #tpu.memory_space<vmem>>, vector<8x128xf32>
    tpu.vector_store %arg12[%c0_27, %c0_28], %14 {strides = array<i32>} : memref<8x512xf32, #tpu.memory_space<vmem>>, vector<8x128xf32>,
    %c0_29 = arith.constant 0 : index
    %c128 = arith.constant 128 : index
    %39 = vector.load %arg12[%c0_29, %c128] : memref<8x512xf32, #tpu.memory_space<vmem>>, vector<8x128xf32>
    tpu.vector_store %arg12[%c0_29, %c128], %15 {strides = array<i32>} : memref<8x512xf32, #tpu.memory_space<vmem>>, vector<8x128xf32>,
    %c0_30 = arith.constant 0 : index
    %c256 = arith.constant 256 : index
    %40 = vector.load %arg12[%c0_30, %c256] : memref<8x512xf32, #tpu.memory_space<vmem>>, vector<8x128xf32>
    tpu.vector_store %arg12[%c0_30, %c256], %21 {strides = array<i32>} : memref<8x512xf32, #tpu.memory_space<vmem>>, vector<8x128xf32>,
    %c0_31 = arith.constant 0 : index
    %c384 = arith.constant 384 : index
    %41 = vector.load %arg12[%c0_31, %c384] : memref<8x512xf32, #tpu.memory_space<vmem>>, vector<8x128xf32>
    tpu.vector_store %arg12[%c0_31, %c384], %18 {strides = array<i32>} : memref<8x512xf32, #tpu.memory_space<vmem>>, vector<8x128xf32>,
    return
  }
  func.func @transform_0(%arg0: i32) -> (i32, i32) {
    %c0_i32 = arith.constant 0 : i32
    %c0_i32_0 = arith.constant 0 : i32
    return %arg0, %c0_i32 : i32, i32
  }
  func.func @transform_1(%arg0: i32) -> (i32, i32) {
    %c0_i32 = arith.constant 0 : i32
    %c0_i32_0 = arith.constant 0 : i32
    return %arg0, %c0_i32 : i32, i32
  }
  func.func @transform_2(%arg0: i32) -> (i32, i32) {
    %c0_i32 = arith.constant 0 : i32
    %c0_i32_0 = arith.constant 0 : i32
    %c0_i32_1 = arith.constant 0 : i32
    return %c0_i32, %c0_i32_0 : i32, i32
  }
  func.func @transform_3(%arg0: i32) -> (i32, i32) {
    %c0_i32 = arith.constant 0 : i32
    %c0_i32_0 = arith.constant 0 : i32
    %c0_i32_1 = arith.constant 0 : i32
    return %c0_i32, %c0_i32_0 : i32, i32
  }
  func.func @transform_4(%arg0: i32) -> (i32, i32) {
    %c0_i32 = arith.constant 0 : i32
    %c0_i32_0 = arith.constant 0 : i32
    %c0_i32_1 = arith.constant 0 : i32
    return %c0_i32, %c0_i32_0 : i32, i32
  }
  func.func @transform_5(%arg0: i32) -> (i32, i32) {
    %c0_i32 = arith.constant 0 : i32
    %c0_i32_0 = arith.constant 0 : i32
    %c0_i32_1 = arith.constant 0 : i32
    return %c0_i32, %c0_i32_0 : i32, i32
  }
  func.func @transform_6(%arg0: i32) -> (i32, i32) {
    %c0_i32 = arith.constant 0 : i32
    %c0_i32_0 = arith.constant 0 : i32
    %c0_i32_1 = arith.constant 0 : i32
    return %c0_i32, %c0_i32_0 : i32, i32
  }
  func.func @transform_7(%arg0: i32) -> (i32, i32) {
    %c0_i32 = arith.constant 0 : i32
    %c0_i32_0 = arith.constant 0 : i32
    %c0_i32_1 = arith.constant 0 : i32
    return %c0_i32, %c0_i32_0 : i32, i32
  }
  func.func @transform_8(%arg0: i32) -> (i32, i32) {
    %c0_i32 = arith.constant 0 : i32
    %c0_i32_0 = arith.constant 0 : i32
    %c0_i32_1 = arith.constant 0 : i32
    return %c0_i32, %c0_i32_0 : i32, i32
  }
  func.func @transform_9(%arg0: i32) -> (i32, i32) {
    %c0_i32 = arith.constant 0 : i32
    %c0_i32_0 = arith.constant 0 : i32
    %c0_i32_1 = arith.constant 0 : i32
    return %c0_i32, %c0_i32_0 : i32, i32
  }
  func.func @transform_10(%arg0: i32) -> (i32, i32) {
    %c0_i32 = arith.constant 0 : i32
    %c0_i32_0 = arith.constant 0 : i32
    return %arg0, %c0_i32 : i32, i32
  }
  func.func @transform_11(%arg0: i32) -> (i32, i32) {
    %c0_i32 = arith.constant 0 : i32
    %c0_i32_0 = arith.constant 0 : i32
    return %arg0, %c0_i32 : i32, i32
  }
}

</mosaic_0001>

<llo_original>
// kernel: vae_forward.1
$region0: #{vae_forward.1}
  #allocation0 [shape = 'u32[]', space=smem, size = 0x4, offset = 0x4, fixed_abs, tag = 'smem constant byte address 0x4 - core index']
  #allocation1 [shape = 'u32[144,128]{1,0:T(1,128)}', space=vmem, size = 0x12000, scoped, tag = 'internal scratch']
  %s0 = inlined_call_operand.vmem [shape: bf16[8,1024], index: 0, kind: input, shape index: {}]
  %s1 = inlined_call_operand.vmem [shape: f32[8,128], index: 1, kind: input, shape index: {}]
  %s2 = inlined_call_operand.hbm [shape: bf16[1024,128], index: 2, kind: input, shape index: {}]
  %s3 = inlined_call_operand.vmem [shape: f32[1,128], index: 3, kind: input, shape index: {}]
  %s4 = inlined_call_operand.vmem [shape: bf16[128,256], index: 4, kind: input, shape index: {}]
  %s5 = inlined_call_operand.vmem [shape: f32[1,256], index: 5, kind: input, shape index: {}]
  %s6 = inlined_call_operand.vmem [shape: bf16[128,128], index: 6, kind: input, shape index: {}]
  %s7 = inlined_call_operand.vmem [shape: f32[1,128], index: 7, kind: input, shape index: {}]
  %s8 = inlined_call_operand.hbm [shape: bf16[128,1024], index: 8, kind: input, shape index: {}]
  %s9 = inlined_call_operand.vmem [shape: f32[1,1024], index: 9, kind: input, shape index: {}]
  %s10 = inlined_call_operand.vmem [shape: bf16[8,1024], index: 10, kind: output, shape index: {0}]
  %s11 = inlined_call_operand.vmem [shape: f32[8,512], index: 11, kind: output, shape index: {1}]
  %12 = xla_tuple %s10, %s11
  %s13 = sld [smem:[#allocation0]]
  $region66: #{vae_forward.1} parent=0
    _
  %s15 = ssub.s32 1, %s13
  %s16 = scalar_select 0, %s15, %s13
  $region1: #{vae_forward.1} parent=0
    #allocation2 [shape = 'u8[262144]{0}', space=vmem, size = 0x40000, scoped, tag = 'input window, operand 2, single buffered']
    #allocation3 [shape = 's32[1]{0}', space=sflag, size = 0x4, scoped, tag = 'scoped memory for vae_forward.1']
    #allocation4 [shape = 'u8[262144]{0}', space=vmem, size = 0x40000, scoped, tag = 'input window, operand 8, single buffered']
    #allocation5 [shape = 's32[1]{0}', space=sflag, size = 0x4, scoped, tag = 'scoped memory for vae_forward.1']
    %17 = vsyncpa [#allocation3], 0
    %18 = vsyncpa [#allocation5], 0
    // Predicated region
    $region2: #{vae_forward.1} parent=1 // pred_check
      _
    $region3: #{vae_forward.1} parent=1 // pred_check_branch
      %20 = sbr.rel (0) target = $region5
    $region4: #{vae_forward.1} parent=1 // pred_region
      _
    $region5: #{vae_forward.1} parent=1 // pred_fallthru
      _
    // Predicated region
    $region6: #{vae_forward.1} parent=1 // pred_check
      _
    $region7: #{vae_forward.1} parent=1 // pred_check_branch
      %22 = sbr.rel (0) target = $region9
    $region8: #{vae_forward.1} parent=1 // pred_region
      _
    $region9: #{vae_forward.1} parent=1 // pred_fallthru
      _
    // Predicated region
    $region10: #{vae_forward.1} parent=1 // pred_check
      _
    $region11: #{vae_forward.1} parent=1 // pred_check_branch
      %24 = sbr.rel (0) target = $region13
    $region12: #{vae_forward.1} parent=1 // pred_region
      %s26 = ssub.s32 8192, 8192
      %27 = vsyncadd [#allocation3], %s26
      %s28 = sshll.u32 [#allocation2], 4
      %s29 = int_to_ptr.vmem [resolvable:$true] %s28
      %34 = dma.hbm_to_vmem [thread:$0]  %s2, 8192, %s29, [#allocation3], 64, 64, 4
    $region13: #{vae_forward.1} parent=1 // pred_fallthru
      _
    // Predicated region
    $region14: #{vae_forward.1} parent=1 // pred_check
      _
    $region15: #{vae_forward.1} parent=1 // pred_check_branch
      %36 = sbr.rel (0) target = $region17
    $region16: #{vae_forward.1} parent=1 // pred_region
      _
    $region17: #{vae_forward.1} parent=1 // pred_fallthru
      _
    // Predicated region
    $region18: #{vae_forward.1} parent=1 // pred_check
      _
    $region19: #{vae_forward.1} parent=1 // pred_check_branch
      %38 = sbr.rel (0) target = $region21
    $region20: #{vae_forward.1} parent=1 // pred_region
      _
    $region21: #{vae_forward.1} parent=1 // pred_fallthru
      _
    // Predicated region
    $region22: #{vae_forward.1} parent=1 // pred_check
      _
    $region23: #{vae_forward.1} parent=1 // pred_check_branch
      %40 = sbr.rel (0) target = $region25
    $region24: #{vae_forward.1} parent=1 // pred_region
      _
    $region25: #{vae_forward.1} parent=1 // pred_fallthru
      _
    // Predicated region
    $region26: #{vae_forward.1} parent=1 // pred_check
      _
    $region27: #{vae_forward.1} parent=1 // pred_check_branch
      %42 = sbr.rel (0) target = $region29
    $region28: #{vae_forward.1} parent=1 // pred_region
      _
    $region29: #{vae_forward.1} parent=1 // pred_fallthru
      _
    // Predicated region
    $region30: #{vae_forward.1} parent=1 // pred_check
      _
    $region31: #{vae_forward.1} parent=1 // pred_check_branch
      %44 = sbr.rel (0) target = $region33
    $region32: #{vae_forward.1} parent=1 // pred_region
      _
    $region33: #{vae_forward.1} parent=1 // pred_fallthru
      _
    // Predicated region
    $region34: #{vae_forward.1} parent=1 // pred_check
      _
    $region35: #{vae_forward.1} parent=1 // pred_check_branch
      %46 = sbr.rel (0) target = $region37
    $region36: #{vae_forward.1} parent=1 // pred_region
      %s48 = ssub.s32 8192, 8192
      %49 = vsyncadd [#allocation5], %s48
      %s50 = sshll.u32 [#allocation4], 4
      %s51 = int_to_ptr.vmem [resolvable:$true] %s50
      %56 = dma.hbm_to_vmem [thread:$0]  %s8, 8192, %s51, [#allocation5], 512, 512, 32
    $region37: #{vae_forward.1} parent=1 // pred_fallthru
      _
    // Predicated region
    $region38: #{vae_forward.1} parent=1 // pred_check
      _
    $region39: #{vae_forward.1} parent=1 // pred_check_branch
      %58 = sbr.rel (0) target = $region41
    $region40: #{vae_forward.1} parent=1 // pred_region
      _
    $region41: #{vae_forward.1} parent=1 // pred_fallthru
      _
    // Predicated region
    $region42: #{vae_forward.1} parent=1 // pred_check
      _
    $region43: #{vae_forward.1} parent=1 // pred_check_branch
      %60 = sbr.rel (0) target = $region45
    $region44: #{vae_forward.1} parent=1 // pred_region
      %61 = dma.done [#allocation3], 8192
    $region45: #{vae_forward.1} parent=1 // pred_fallthru
      _
    // Predicated region
    $region46: #{vae_forward.1} parent=1 // pred_check
      _
    $region47: #{vae_forward.1} parent=1 // pred_check_branch
      %63 = sbr.rel (0) target = $region49
    $region48: #{vae_forward.1} parent=1 // pred_region
      %64 = dma.done [#allocation5], 8192
    $region49: #{vae_forward.1} parent=1 // pred_fallthru
      _
    %v66 = vld [vmem:[%s0] sm:$0xff]
    %v67 = vld [vmem:[%s0 + $0x8] sm:$0xff]
    %v68 = vld [vmem:[%s0 + $0x10] sm:$0xff]
    %v69 = vld [vmem:[%s0 + $0x18] sm:$0xff]
    %v70 = vld [vmem:[#allocation2] sm:$0xf]
    %v71 = vld [vmem:[#allocation2 + $0x4] sm:$0xf]
    %v72 = vld [vmem:[#allocation2 + $0x8] sm:$0xf]
    %v73 = vld [vmem:[#allocation2 + $0xc] sm:$0xf]
    %v74 = vld [vmem:[#allocation2 + $0x10] sm:$0xf]
    %v75 = vld [vmem:[#allocation2 + $0x14] sm:$0xf]
    %v76 = vld [vmem:[#allocation2 + $0x18] sm:$0xf]
    %v77 = vld [vmem:[#allocation2 + $0x1c] sm:$0xf]
    %v78 = vld [vmem:[#allocation2 + $0x20] sm:$0xf]
    %v79 = vld [vmem:[#allocation2 + $0x24] sm:$0xf]
    %v80 = vld [vmem:[#allocation2 + $0x28] sm:$0xf]
    %v81 = vld [vmem:[#allocation2 + $0x2c] sm:$0xf]
    %v82 = vld [vmem:[#allocation2 + $0x30] sm:$0xf]
    %v83 = vld [vmem:[#allocation2 + $0x34] sm:$0xf]
    %v84 = vld [vmem:[#allocation2 + $0x38] sm:$0xf]
    %v85 = vld [vmem:[#allocation2 + $0x3c] sm:$0xf]
    %v86 = vld [vmem:[#allocation2 + $0x40] sm:$0xf]
    %v87 = vld [vmem:[#allocation2 + $0x44] sm:$0xf]
    %v88 = vld [vmem:[#allocation2 + $0x48] sm:$0xf]
    %v89 = vld [vmem:[#allocation2 + $0x4c] sm:$0xf]
    %v90 = vld [vmem:[#allocation2 + $0x50] sm:$0xf]
    %v91 = vld [vmem:[#allocation2 + $0x54] sm:$0xf]
    %v92 = vld [vmem:[#allocation2 + $0x58] sm:$0xf]
    %v93 = vld [vmem:[#allocation2 + $0x5c] sm:$0xf]
    %v94 = vld [vmem:[#allocation2 + $0x60] sm:$0xf]
    %v95 = vld [vmem:[#allocation2 + $0x64] sm:$0xf]
    %v96 = vld [vmem:[#allocation2 + $0x68] sm:$0xf]
    %v97 = vld [vmem:[#allocation2 + $0x6c] sm:$0xf]
    %v98 = vld [vmem:[#allocation2 + $0x70] sm:$0xf]
    %v99 = vld [vmem:[#allocation2 + $0x74] sm:$0xf]
    %v100 = vld [vmem:[#allocation2 + $0x78] sm:$0xf]
    %v101 = vld [vmem:[#allocation2 + $0x7c] sm:$0xf]
    %v102 = vld [vmem:[#allocation2 + $0x80] sm:$0xf]
    %v103 = vld [vmem:[#allocation2 + $0x84] sm:$0xf]
    %v104 = vld [vmem:[#allocation2 + $0x88] sm:$0xf]
    %v105 = vld [vmem:[#allocation2 + $0x8c] sm:$0xf]
    %v106 = vld [vmem:[#allocation2 + $0x90] sm:$0xf]
    %v107 = vld [vmem:[#allocation2 + $0x94] sm:$0xf]
    %v108 = vld [vmem:[#allocation2 + $0x98] sm:$0xf]
    %v109 = vld [vmem:[#allocation2 + $0x9c] sm:$0xf]
    %v110 = vld [vmem:[#allocation2 + $0xa0] sm:$0xf]
    %v111 = vld [vmem:[#allocation2 + $0xa4] sm:$0xf]
    %v112 = vld [vmem:[#allocation2 + $0xa8] sm:$0xf]
    %v113 = vld [vmem:[#allocation2 + $0xac] sm:$0xf]
    %v114 = vld [vmem:[#allocation2 + $0xb0] sm:$0xf]
    %v115 = vld [vmem:[#allocation2 + $0xb4] sm:$0xf]
    %v116 = vld [vmem:[#allocation2 + $0xb8] sm:$0xf]
    %v117 = vld [vmem:[#allocation2 + $0xbc] sm:$0xf]
    %v118 = vld [vmem:[#allocation2 + $0xc0] sm:$0xf]
    %v119 = vld [vmem:[#allocation2 + $0xc4] sm:$0xf]
    %v120 = vld [vmem:[#allocation2 + $0xc8] sm:$0xf]
    %v121 = vld [vmem:[#allocation2 + $0xcc] sm:$0xf]
    %v122 = vld [vmem:[#allocation2 + $0xd0] sm:$0xf]
    %v123 = vld [vmem:[#allocation2 + $0xd4] sm:$0xf]
    %v124 = vld [vmem:[#allocation2 + $0xd8] sm:$0xf]
    %v125 = vld [vmem:[#allocation2 + $0xdc] sm:$0xf]
    %v126 = vld [vmem:[#allocation2 + $0xe0] sm:$0xf]
    %v127 = vld [vmem:[#allocation2 + $0xe4] sm:$0xf]
    %v128 = vld [vmem:[#allocation2 + $0xe8] sm:$0xf]
    %v129 = vld [vmem:[#allocation2 + $0xec] sm:$0xf]
    %v130 = vld [vmem:[#allocation2 + $0xf0] sm:$0xf]
    %v131 = vld [vmem:[#allocation2 + $0xf4] sm:$0xf]
    %v132 = vld [vmem:[#allocation2 + $0xf8] sm:$0xf]
    %v133 = vld [vmem:[#allocation2 + $0xfc] sm:$0xf]
    %v134 = vld [vmem:[#allocation2 + $0x100] sm:$0xf]
    %v135 = vld [vmem:[#allocation2 + $0x104] sm:$0xf]
    %v136 = vld [vmem:[#allocation2 + $0x108] sm:$0xf]
    %v137 = vld [vmem:[#allocation2 + $0x10c] sm:$0xf]
    %v138 = vld [vmem:[#allocation2 + $0x110] sm:$0xf]
    %v139 = vld [vmem:[#allocation2 + $0x114] sm:$0xf]
    %v140 = vld [vmem:[#allocation2 + $0x118] sm:$0xf]
    %v141 = vld [vmem:[#allocation2 + $0x11c] sm:$0xf]
    %v142 = vld [vmem:[#allocation2 + $0x120] sm:$0xf]
    %v143 = vld [vmem:[#allocation2 + $0x124] sm:$0xf]
    %v144 = vld [vmem:[#allocation2 + $0x128] sm:$0xf]
    %v145 = vld [vmem:[#allocation2 + $0x12c] sm:$0xf]
    %v146 = vld [vmem:[#allocation2 + $0x130] sm:$0xf]
    %v147 = vld [vmem:[#allocation2 + $0x134] sm:$0xf]
    %v148 = vld [vmem:[#allocation2 + $0x138] sm:$0xf]
    %v149 = vld [vmem:[#allocation2 + $0x13c] sm:$0xf]
    %v150 = vld [vmem:[#allocation2 + $0x140] sm:$0xf]
    %v151 = vld [vmem:[#allocation2 + $0x144] sm:$0xf]
    %v152 = vld [vmem:[#allocation2 + $0x148] sm:$0xf]
    %v153 = vld [vmem:[#allocation2 + $0x14c] sm:$0xf]
    %v154 = vld [vmem:[#allocation2 + $0x150] sm:$0xf]
    %v155 = vld [vmem:[#allocation2 + $0x154] sm:$0xf]
    %v156 = vld [vmem:[#allocation2 + $0x158] sm:$0xf]
    %v157 = vld [vmem:[#allocation2 + $0x15c] sm:$0xf]
    %v158 = vld [vmem:[#allocation2 + $0x160] sm:$0xf]
    %v159 = vld [vmem:[#allocation2 + $0x164] sm:$0xf]
    %v160 = vld [vmem:[#allocation2 + $0x168] sm:$0xf]
    %v161 = vld [vmem:[#allocation2 + $0x16c] sm:$0xf]
    %v162 = vld [vmem:[#allocation2 + $0x170] sm:$0xf]
    %v163 = vld [vmem:[#allocation2 + $0x174] sm:$0xf]
    %v164 = vld [vmem:[#allocation2 + $0x178] sm:$0xf]
    %v165 = vld [vmem:[#allocation2 + $0x17c] sm:$0xf]
    %v166 = vld [vmem:[#allocation2 + $0x180] sm:$0xf]
    %v167 = vld [vmem:[#allocation2 + $0x184] sm:$0xf]
    %v168 = vld [vmem:[#allocation2 + $0x188] sm:$0xf]
    %v169 = vld [vmem:[#allocation2 + $0x18c] sm:$0xf]
    %v170 = vld [vmem:[#allocation2 + $0x190] sm:$0xf]
    %v171 = vld [vmem:[#allocation2 + $0x194] sm:$0xf]
    %v172 = vld [vmem:[#allocation2 + $0x198] sm:$0xf]
    %v173 = vld [vmem:[#allocation2 + $0x19c] sm:$0xf]
    %v174 = vld [vmem:[#allocation2 + $0x1a0] sm:$0xf]
    %v175 = vld [vmem:[#allocation2 + $0x1a4] sm:$0xf]
    %v176 = vld [vmem:[#allocation2 + $0x1a8] sm:$0xf]
    %v177 = vld [vmem:[#allocation2 + $0x1ac] sm:$0xf]
    %v178 = vld [vmem:[#allocation2 + $0x1b0] sm:$0xf]
    %v179 = vld [vmem:[#allocation2 + $0x1b4] sm:$0xf]
    %v180 = vld [vmem:[#allocation2 + $0x1b8] sm:$0xf]
    %v181 = vld [vmem:[#allocation2 + $0x1bc] sm:$0xf]
    %v182 = vld [vmem:[#allocation2 + $0x1c0] sm:$0xf]
    %v183 = vld [vmem:[#allocation2 + $0x1c4] sm:$0xf]
    %v184 = vld [vmem:[#allocation2 + $0x1c8] sm:$0xf]
    %v185 = vld [vmem:[#allocation2 + $0x1cc] sm:$0xf]
    %v186 = vld [vmem:[#allocation2 + $0x1d0] sm:$0xf]
    %v187 = vld [vmem:[#allocation2 + $0x1d4] sm:$0xf]
    %v188 = vld [vmem:[#allocation2 + $0x1d8] sm:$0xf]
    %v189 = vld [vmem:[#allocation2 + $0x1dc] sm:$0xf]
    %v190 = vld [vmem:[#allocation2 + $0x1e0] sm:$0xf]
    %v191 = vld [vmem:[#allocation2 + $0x1e4] sm:$0xf]
    %v192 = vld [vmem:[#allocation2 + $0x1e8] sm:$0xf]
    %v193 = vld [vmem:[#allocation2 + $0x1ec] sm:$0xf]
    %v194 = vld [vmem:[#allocation2 + $0x1f0] sm:$0xf]
    %v195 = vld [vmem:[#allocation2 + $0x1f4] sm:$0xf]
    %v196 = vld [vmem:[#allocation2 + $0x1f8] sm:$0xf]
    %v197 = vld [vmem:[#allocation2 + $0x1fc] sm:$0xf]
    %v198 = vld [vmem:[%s3] sm:$0x1]
    %v200 = vlaneseq
    %v201 = vshrl.u32 %v200, 7
    %v202 = vsub.s32 0, %v201
    %v203 = vrot.slane %v198, %v202
    %v209 = vunpack.c.l.b16 %v66
    %v210 = vunpack.c.h.b16 %v66
    %v211 = vunpack.c.l.b16 %v67
    %v212 = vunpack.c.h.b16 %v67
    %v213 = vunpack.c.l.b16 %v68
    %v214 = vunpack.c.h.b16 %v68
    %v215 = vunpack.c.l.b16 %v69
    %v216 = vunpack.c.h.b16 %v69
    %v217 = vpack.c.b16 %v209, %v209
    %v218 = vpack.c.b16 %v210, %v210
    %v219 = vpack.c.b16 %v211, %v211
    %v220 = vpack.c.b16 %v212, %v212
    %v221 = vpack.c.b16 %v213, %v213
    %v222 = vpack.c.b16 %v214, %v214
    %v223 = vpack.c.b16 %v215, %v215
    %v224 = vpack.c.b16 %v216, %v216
    %v361 = vunpack.c.l.b16 %v70
    %v362 = vunpack.c.l.b16 %v71
    %v363 = vunpack.c.l.b16 %v72
    %v364 = vunpack.c.l.b16 %v73
    %v365 = vunpack.c.l.b16 %v74
    %v366 = vunpack.c.l.b16 %v75
    %v367 = vunpack.c.l.b16 %v76
    %v368 = vunpack.c.l.b16 %v77
    %v369 = vunpack.c.l.b16 %v78
    %v370 = vunpack.c.l.b16 %v79
    %v371 = vunpack.c.l.b16 %v80
    %v372 = vunpack.c.l.b16 %v81
    %v373 = vunpack.c.l.b16 %v82
    %v374 = vunpack.c.l.b16 %v83
    %v375 = vunpack.c.l.b16 %v84
    %v376 = vunpack.c.l.b16 %v85
    %v377 = vunpack.c.l.b16 %v86
    %v378 = vunpack.c.l.b16 %v87
    %v379 = vunpack.c.l.b16 %v88
    %v380 = vunpack.c.l.b16 %v89
    %v381 = vunpack.c.l.b16 %v90
    %v382 = vunpack.c.l.b16 %v91
    %v383 = vunpack.c.l.b16 %v92
    %v384 = vunpack.c.l.b16 %v93
    %v385 = vunpack.c.l.b16 %v94
    %v386 = vunpack.c.l.b16 %v95
    %v387 = vunpack.c.l.b16 %v96
    %v388 = vunpack.c.l.b16 %v97
    %v389 = vunpack.c.l.b16 %v98
    %v390 = vunpack.c.l.b16 %v99
    %v391 = vunpack.c.l.b16 %v100
    %v392 = vunpack.c.l.b16 %v101
    %v393 = vunpack.c.l.b16 %v102
    %v394 = vunpack.c.l.b16 %v103
    %v395 = vunpack.c.l.b16 %v104
    %v396 = vunpack.c.l.b16 %v105
    %v397 = vunpack.c.l.b16 %v106
    %v398 = vunpack.c.l.b16 %v107
    %v399 = vunpack.c.l.b16 %v108
    %v400 = vunpack.c.l.b16 %v109
    %v401 = vunpack.c.l.b16 %v110
    %v402 = vunpack.c.l.b16 %v111
    %v403 = vunpack.c.l.b16 %v112
    %v404 = vunpack.c.l.b16 %v113
    %v405 = vunpack.c.l.b16 %v114
    %v406 = vunpack.c.l.b16 %v115
    %v407 = vunpack.c.l.b16 %v116
    %v408 = vunpack.c.l.b16 %v117
    %v409 = vunpack.c.l.b16 %v118
    %v410 = vunpack.c.l.b16 %v119
    %v411 = vunpack.c.l.b16 %v120
    %v412 = vunpack.c.l.b16 %v121
    %v413 = vunpack.c.l.b16 %v122
    %v414 = vunpack.c.l.b16 %v123
    %v415 = vunpack.c.l.b16 %v124
    %v416 = vunpack.c.l.b16 %v125
    %v417 = vunpack.c.l.b16 %v126
    %v418 = vunpack.c.l.b16 %v127
    %v419 = vunpack.c.l.b16 %v128
    %v420 = vunpack.c.l.b16 %v129
    %v421 = vunpack.c.l.b16 %v130
    %v422 = vunpack.c.l.b16 %v131
    %v423 = vunpack.c.l.b16 %v132
    %v424 = vunpack.c.l.b16 %v133
    %v425 = vunpack.c.l.b16 %v134
    %v426 = vunpack.c.l.b16 %v135
    %v427 = vunpack.c.l.b16 %v136
    %v428 = vunpack.c.l.b16 %v137
    %v429 = vunpack.c.l.b16 %v138
    %v430 = vunpack.c.l.b16 %v139
    %v431 = vunpack.c.l.b16 %v140
    %v432 = vunpack.c.l.b16 %v141
    %v433 = vunpack.c.l.b16 %v142
    %v434 = vunpack.c.l.b16 %v143
    %v435 = vunpack.c.l.b16 %v144
    %v436 = vunpack.c.l.b16 %v145
    %v437 = vunpack.c.l.b16 %v146
    %v438 = vunpack.c.l.b16 %v147
    %v439 = vunpack.c.l.b16 %v148
    %v440 = vunpack.c.l.b16 %v149
    %v441 = vunpack.c.l.b16 %v150
    %v442 = vunpack.c.l.b16 %v151
    %v443 = vunpack.c.l.b16 %v152
    %v444 = vunpack.c.l.b16 %v153
    %v445 = vunpack.c.l.b16 %v154
    %v446 = vunpack.c.l.b16 %v155
    %v447 = vunpack.c.l.b16 %v156
    %v448 = vunpack.c.l.b16 %v157
    %v449 = vunpack.c.l.b16 %v158
    %v450 = vunpack.c.l.b16 %v159
    %v451 = vunpack.c.l.b16 %v160
    %v452 = vunpack.c.l.b16 %v161
    %v453 = vunpack.c.l.b16 %v162
    %v454 = vunpack.c.l.b16 %v163
    %v455 = vunpack.c.l.b16 %v164
    %v456 = vunpack.c.l.b16 %v165
    %v457 = vunpack.c.l.b16 %v166
    %v458 = vunpack.c.l.b16 %v167
    %v459 = vunpack.c.l.b16 %v168
    %v460 = vunpack.c.l.b16 %v169
    %v461 = vunpack.c.l.b16 %v170
    %v462 = vunpack.c.l.b16 %v171
    %v463 = vunpack.c.l.b16 %v172
    %v464 = vunpack.c.l.b16 %v173
    %v465 = vunpack.c.l.b16 %v174
    %v466 = vunpack.c.l.b16 %v175
    %v467 = vunpack.c.l.b16 %v176
    %v468 = vunpack.c.l.b16 %v177
    %v469 = vunpack.c.l.b16 %v178
    %v470 = vunpack.c.l.b16 %v179
    %v471 = vunpack.c.l.b16 %v180
    %v472 = vunpack.c.l.b16 %v181
    %v473 = vunpack.c.l.b16 %v182
    %v474 = vunpack.c.l.b16 %v183
    %v475 = vunpack.c.l.b16 %v184
    %v476 = vunpack.c.l.b16 %v185
    %v477 = vunpack.c.l.b16 %v186
    %v478 = vunpack.c.l.b16 %v187
    %v479 = vunpack.c.l.b16 %v188
    %v480 = vunpack.c.l.b16 %v189
    %v481 = vunpack.c.l.b16 %v190
    %v482 = vunpack.c.l.b16 %v191
    %v483 = vunpack.c.l.b16 %v192
    %v484 = vunpack.c.l.b16 %v193
    %v485 = vunpack.c.l.b16 %v194
    %v486 = vunpack.c.l.b16 %v195
    %v487 = vunpack.c.l.b16 %v196
    %v488 = vunpack.c.l.b16 %v197
    %v489 = vpack.c.b16 %v362, %v361
    %v490 = vpack.c.b16 %v364, %v363
    %v491 = vpack.c.b16 %v366, %v365
    %v492 = vpack.c.b16 %v368, %v367
    %v493 = vpack.c.b16 %v370, %v369
    %v494 = vpack.c.b16 %v372, %v371
    %v495 = vpack.c.b16 %v374, %v373
    %v496 = vpack.c.b16 %v376, %v375
    %v497 = vpack.c.b16 %v378, %v377
    %v498 = vpack.c.b16 %v380, %v379
    %v499 = vpack.c.b16 %v382, %v381
    %v500 = vpack.c.b16 %v384, %v383
    %v501 = vpack.c.b16 %v386, %v385
    %v502 = vpack.c.b16 %v388, %v387
    %v503 = vpack.c.b16 %v390, %v389
    %v504 = vpack.c.b16 %v392, %v391
    %v505 = vpack.c.b16 %v394, %v393
    %v506 = vpack.c.b16 %v396, %v395
    %v507 = vpack.c.b16 %v398, %v397
    %v508 = vpack.c.b16 %v400, %v399
    %v509 = vpack.c.b16 %v402, %v401
    %v510 = vpack.c.b16 %v404, %v403
    %v511 = vpack.c.b16 %v406, %v405
    %v512 = vpack.c.b16 %v408, %v407
    %v513 = vpack.c.b16 %v410, %v409
    %v514 = vpack.c.b16 %v412, %v411
    %v515 = vpack.c.b16 %v414, %v413
    %v516 = vpack.c.b16 %v416, %v415
    %v517 = vpack.c.b16 %v418, %v417
    %v518 = vpack.c.b16 %v420, %v419
    %v519 = vpack.c.b16 %v422, %v421
    %v520 = vpack.c.b16 %v424, %v423
    %v521 = vpack.c.b16 %v426, %v425
    %v522 = vpack.c.b16 %v428, %v427
    %v523 = vpack.c.b16 %v430, %v429
    %v524 = vpack.c.b16 %v432, %v431
    %v525 = vpack.c.b16 %v434, %v433
    %v526 = vpack.c.b16 %v436, %v435
    %v527 = vpack.c.b16 %v438, %v437
    %v528 = vpack.c.b16 %v440, %v439
    %v529 = vpack.c.b16 %v442, %v441
    %v530 = vpack.c.b16 %v444, %v443
    %v531 = vpack.c.b16 %v446, %v445
    %v532 = vpack.c.b16 %v448, %v447
    %v533 = vpack.c.b16 %v450, %v449
    %v534 = vpack.c.b16 %v452, %v451
    %v535 = vpack.c.b16 %v454, %v453
    %v536 = vpack.c.b16 %v456, %v455
    %v537 = vpack.c.b16 %v458, %v457
    %v538 = vpack.c.b16 %v460, %v459
    %v539 = vpack.c.b16 %v462, %v461
    %v540 = vpack.c.b16 %v464, %v463
    %v541 = vpack.c.b16 %v466, %v465
    %v542 = vpack.c.b16 %v468, %v467
    %v543 = vpack.c.b16 %v470, %v469
    %v544 = vpack.c.b16 %v472, %v471
    %v545 = vpack.c.b16 %v474, %v473
    %v546 = vpack.c.b16 %v476, %v475
    %v547 = vpack.c.b16 %v478, %v477
    %v548 = vpack.c.b16 %v480, %v479
    %v549 = vpack.c.b16 %v482, %v481
    %v550 = vpack.c.b16 %v484, %v483
    %v551 = vpack.c.b16 %v486, %v485
    %v552 = vpack.c.b16 %v488, %v487
    %617 = vmatprep.subr.bf16.mxu0 0
    %618 = vmatpush1.bf16.msra.mxu0 %v496
    %619 = vmatprep.subr.bf16.mxu0 0
    %620 = vmatpush1.bf16.msra.mxu0 %v495
    %621 = vmatprep.subr.bf16.mxu0 0
    %622 = vmatpush1.bf16.msra.mxu0 %v494
    %623 = vmatprep.subr.bf16.mxu0 0
    %624 = vmatpush1.bf16.msra.mxu0 %v493
    %625 = vmatprep.subr.bf16.mxu0 0
    %626 = vmatpush1.bf16.msra.mxu0 %v492
    %627 = vmatprep.subr.bf16.mxu0 0
    %628 = vmatpush1.bf16.msra.mxu0 %v491
    %629 = vmatprep.subr.bf16.mxu0 0
    %630 = vmatpush1.bf16.msra.mxu0 %v490
    %631 = vmatprep.subr.bf16.mxu0 0
    %632 = vmatpush1.bf16.msra.mxu0 %v489
    %633 = vmatprep.subr.bf16.mxu0 0
    %634 = vmatpush2.bf16.msra.mxu0 %v504
    %635 = vmatprep.subr.bf16.mxu0 0
    %636 = vmatpush2.bf16.msra.mxu0 %v503
    %637 = vmatprep.subr.bf16.mxu0 0
    %638 = vmatpush2.bf16.msra.mxu0 %v502
    %639 = vmatprep.subr.bf16.mxu0 0
    %640 = vmatpush2.bf16.msra.mxu0 %v501
    %641 = vmatprep.subr.bf16.mxu0 0
    %642 = vmatpush2.bf16.msra.mxu0 %v500
    %643 = vmatprep.subr.bf16.mxu0 0
    %644 = vmatpush2.bf16.msra.mxu0 %v499
    %645 = vmatprep.subr.bf16.mxu0 0
    %646 = vmatpush2.bf16.msra.mxu0 %v498
    %647 = vmatprep.subr.bf16.mxu0 0
    %648 = vmatpush2.bf16.msra.mxu0 %v497
    %649 = vmatprep.mubr.bf16.mxu0 %v218
    %650 = vmatmul.mubr.bf16.gmra.mxu0 %v217
    %v651 = vpop.f32.mrf.mxu0
    %v652 = vadd.f32 %v203, %v651
    %v653 = vpop.f32.mrf.mxu0
    %v654 = vpop.f32.mrf.mxu0
    %v655 = vpop.f32.mrf.mxu0
    %656 = vdwg.mxu0
    %657 = vmatprep.subr.bf16.mxu0 0
    %658 = vmatpush1.bf16.msra.mxu0 %v512
    %659 = vmatprep.subr.bf16.mxu0 0
    %660 = vmatpush1.bf16.msra.mxu0 %v511
    %661 = vmatprep.subr.bf16.mxu0 0
    %662 = vmatpush1.bf16.msra.mxu0 %v510
    %663 = vmatprep.subr.bf16.mxu0 0
    %664 = vmatpush1.bf16.msra.mxu0 %v509
    %665 = vmatprep.subr.bf16.mxu0 0
    %666 = vmatpush1.bf16.msra.mxu0 %v508
    %667 = vmatprep.subr.bf16.mxu0 0
    %668 = vmatpush1.bf16.msra.mxu0 %v507
    %669 = vmatprep.subr.bf16.mxu0 0
    %670 = vmatpush1.bf16.msra.mxu0 %v506
    %671 = vmatprep.subr.bf16.mxu0 0
    %672 = vmatpush1.bf16.msra.mxu0 %v505
    %673 = vmatprep.subr.bf16.mxu0 0
    %674 = vmatpush2.bf16.msra.mxu0 %v520
    %675 = vmatprep.subr.bf16.mxu0 0
    %676 = vmatpush2.bf16.msra.mxu0 %v519
    %677 = vmatprep.subr.bf16.mxu0 0
    %678 = vmatpush2.bf16.msra.mxu0 %v518
    %679 = vmatprep.subr.bf16.mxu0 0
    %680 = vmatpush2.bf16.msra.mxu0 %v517
    %681 = vmatprep.subr.bf16.mxu0 0
    %682 = vmatpush2.bf16.msra.mxu0 %v516
    %683 = vmatprep.subr.bf16.mxu0 0
    %684 = vmatpush2.bf16.msra.mxu0 %v515
    %685 = vmatprep.subr.bf16.mxu0 0
    %686 = vmatpush2.bf16.msra.mxu0 %v514
    %687 = vmatprep.subr.bf16.mxu0 0
    %688 = vmatpush2.bf16.msra.mxu0 %v513
    %689 = vmatprep.mubr.bf16.mxu0 %v220
    %690 = vmatmul.mubr.bf16.gmra.mxu0 %v219
    %v691 = vpop.f32.mrf.mxu0
    %v692 = vadd.f32 %v652, %v691
    %v693 = vpop.f32.mrf.mxu0
    %v694 = vpop.f32.mrf.mxu0
    %v695 = vpop.f32.mrf.mxu0
    %696 = vdwg.mxu0
    %697 = vmatprep.subr.bf16.mxu0 0
    %698 = vmatpush1.bf16.msra.mxu0 %v528
    %699 = vmatprep.subr.bf16.mxu0 0
    %700 = vmatpush1.bf16.msra.mxu0 %v527
    %701 = vmatprep.subr.bf16.mxu0 0
    %702 = vmatpush1.bf16.msra.mxu0 %v526
    %703 = vmatprep.subr.bf16.mxu0 0
    %704 = vmatpush1.bf16.msra.mxu0 %v525
    %705 = vmatprep.subr.bf16.mxu0 0
    %706 = vmatpush1.bf16.msra.mxu0 %v524
    %707 = vmatprep.subr.bf16.mxu0 0
    %708 = vmatpush1.bf16.msra.mxu0 %v523
    %709 = vmatprep.subr.bf16.mxu0 0
    %710 = vmatpush1.bf16.msra.mxu0 %v522
    %711 = vmatprep.subr.bf16.mxu0 0
    %712 = vmatpush1.bf16.msra.mxu0 %v521
    %713 = vmatprep.subr.bf16.mxu0 0
    %714 = vmatpush2.bf16.msra.mxu0 %v536
    %715 = vmatprep.subr.bf16.mxu0 0
    %716 = vmatpush2.bf16.msra.mxu0 %v535
    %717 = vmatprep.subr.bf16.mxu0 0
    %718 = vmatpush2.bf16.msra.mxu0 %v534
    %719 = vmatprep.subr.bf16.mxu0 0
    %720 = vmatpush2.bf16.msra.mxu0 %v533
    %721 = vmatprep.subr.bf16.mxu0 0
    %722 = vmatpush2.bf16.msra.mxu0 %v532
    %723 = vmatprep.subr.bf16.mxu0 0
    %724 = vmatpush2.bf16.msra.mxu0 %v531
    %725 = vmatprep.subr.bf16.mxu0 0
    %726 = vmatpush2.bf16.msra.mxu0 %v530
    %727 = vmatprep.subr.bf16.mxu0 0
    %728 = vmatpush2.bf16.msra.mxu0 %v529
    %729 = vmatprep.mubr.bf16.mxu0 %v222
    %730 = vmatmul.mubr.bf16.gmra.mxu0 %v221
    %v731 = vpop.f32.mrf.mxu0
    %v732 = vadd.f32 %v692, %v731
    %v733 = vpop.f32.mrf.mxu0
    %v734 = vpop.f32.mrf.mxu0
    %v735 = vpop.f32.mrf.mxu0
    %736 = vdwg.mxu0
    %737 = vmatprep.subr.bf16.mxu0 0
    %738 = vmatpush1.bf16.msra.mxu0 %v544
    %739 = vmatprep.subr.bf16.mxu0 0
    %740 = vmatpush1.bf16.msra.mxu0 %v543
    %741 = vmatprep.subr.bf16.mxu0 0
    %742 = vmatpush1.bf16.msra.mxu0 %v542
    %743 = vmatprep.subr.bf16.mxu0 0
    %744 = vmatpush1.bf16.msra.mxu0 %v541
    %745 = vmatprep.subr.bf16.mxu0 0
    %746 = vmatpush1.bf16.msra.mxu0 %v540
    %747 = vmatprep.subr.bf16.mxu0 0
    %748 = vmatpush1.bf16.msra.mxu0 %v539
    %749 = vmatprep.subr.bf16.mxu0 0
    %750 = vmatpush1.bf16.msra.mxu0 %v538
    %751 = vmatprep.subr.bf16.mxu0 0
    %752 = vmatpush1.bf16.msra.mxu0 %v537
    %753 = vmatprep.subr.bf16.mxu0 0
    %754 = vmatpush2.bf16.msra.mxu0 %v552
    %755 = vmatprep.subr.bf16.mxu0 0
    %756 = vmatpush2.bf16.msra.mxu0 %v551
    %757 = vmatprep.subr.bf16.mxu0 0
    %758 = vmatpush2.bf16.msra.mxu0 %v550
    %759 = vmatprep.subr.bf16.mxu0 0
    %760 = vmatpush2.bf16.msra.mxu0 %v549
    %761 = vmatprep.subr.bf16.mxu0 0
    %762 = vmatpush2.bf16.msra.mxu0 %v548
    %763 = vmatprep.subr.bf16.mxu0 0
    %764 = vmatpush2.bf16.msra.mxu0 %v547
    %765 = vmatprep.subr.bf16.mxu0 0
    %766 = vmatpush2.bf16.msra.mxu0 %v546
    %767 = vmatprep.subr.bf16.mxu0 0
    %768 = vmatpush2.bf16.msra.mxu0 %v545
    %769 = vmatprep.mubr.bf16.mxu0 %v224
    %770 = vmatmul.mubr.bf16.gmra.mxu0 %v223
    %v771 = vpop.f32.mrf.mxu0
    %v772 = vadd.f32 %v732, %v771
    %v773 = vpop.f32.mrf.mxu0
    %v774 = vpop.f32.mrf.mxu0
    %v775 = vpop.f32.mrf.mxu0
    %776 = vdwg.mxu0
    %v777 = vmax.f32 %v772, 0.0
    %v778 = vpack.c.bf16 %v777, %v777
    %v779 = vld [vmem:[%s4] sm:$0xff]
    %v780 = vld [vmem:[%s4 + $0x8] sm:$0xff]
    %v781 = vld [vmem:[%s4 + $0x10] sm:$0xff]
    %v782 = vld [vmem:[%s4 + $0x18] sm:$0xff]
    %v783 = vld [vmem:[%s4 + $0x20] sm:$0xff]
    %v784 = vld [vmem:[%s4 + $0x28] sm:$0xff]
    %v785 = vld [vmem:[%s4 + $0x30] sm:$0xff]
    %v786 = vld [vmem:[%s4 + $0x38] sm:$0xff]
    %v787 = vld [vmem:[%s4 + $0x40] sm:$0xff]
    %v788 = vld [vmem:[%s4 + $0x48] sm:$0xff]
    %v789 = vld [vmem:[%s4 + $0x50] sm:$0xff]
    %v790 = vld [vmem:[%s4 + $0x58] sm:$0xff]
    %v791 = vld [vmem:[%s4 + $0x60] sm:$0xff]
    %v792 = vld [vmem:[%s4 + $0x68] sm:$0xff]
    %v793 = vld [vmem:[%s4 + $0x70] sm:$0xff]
    %v794 = vld [vmem:[%s4 + $0x78] sm:$0xff]
    %v795 = vld [vmem:[%s5] sm:$0x3]
    %v797 = vlaneseq
    %v798 = vshrl.u32 %v797, 7
    %v799 = vsub.s32 0, %v798
    %v800 = vrot.slane %v795, %v799
    %v801 = vlaneseq
    %v802 = vshrl.u32 %v801, 7
    %v803 = vsub.s32 1, %v802
    %v804 = vrot.slane %v795, %v803
    %v823 = vunpack.c.l.b16 %v779
    %v824 = vunpack.c.h.b16 %v779
    %v825 = vunpack.c.l.b16 %v780
    %v826 = vunpack.c.h.b16 %v780
    %v827 = vunpack.c.l.b16 %v781
    %v828 = vunpack.c.h.b16 %v781
    %v829 = vunpack.c.l.b16 %v782
    %v830 = vunpack.c.h.b16 %v782
    %v831 = vunpack.c.l.b16 %v783
    %v832 = vunpack.c.h.b16 %v783
    %v833 = vunpack.c.l.b16 %v784
    %v834 = vunpack.c.h.b16 %v784
    %v835 = vunpack.c.l.b16 %v785
    %v836 = vunpack.c.h.b16 %v785
    %v837 = vunpack.c.l.b16 %v786
    %v838 = vunpack.c.h.b16 %v786
    %v839 = vunpack.c.l.b16 %v787
    %v840 = vunpack.c.h.b16 %v787
    %v841 = vunpack.c.l.b16 %v788
    %v842 = vunpack.c.h.b16 %v788
    %v843 = vunpack.c.l.b16 %v789
    %v844 = vunpack.c.h.b16 %v789
    %v845 = vunpack.c.l.b16 %v790
    %v846 = vunpack.c.h.b16 %v790
    %v847 = vunpack.c.l.b16 %v791
    %v848 = vunpack.c.h.b16 %v791
    %v849 = vunpack.c.l.b16 %v792
    %v850 = vunpack.c.h.b16 %v792
    %v851 = vunpack.c.l.b16 %v793
    %v852 = vunpack.c.h.b16 %v793
    %v853 = vunpack.c.l.b16 %v794
    %v854 = vunpack.c.h.b16 %v794
    %v855 = vpack.c.b16 %v825, %v823
    %v856 = vpack.c.b16 %v826, %v824
    %v857 = vpack.c.b16 %v829, %v827
    %v858 = vpack.c.b16 %v830, %v828
    %v859 = vpack.c.b16 %v833, %v831
    %v860 = vpack.c.b16 %v834, %v832
    %v861 = vpack.c.b16 %v837, %v835
    %v862 = vpack.c.b16 %v838, %v836
    %v863 = vpack.c.b16 %v841, %v839
    %v864 = vpack.c.b16 %v842, %v840
    %v865 = vpack.c.b16 %v845, %v843
    %v866 = vpack.c.b16 %v846, %v844
    %v867 = vpack.c.b16 %v849, %v847
    %v868 = vpack.c.b16 %v850, %v848
    %v869 = vpack.c.b16 %v853, %v851
    %v870 = vpack.c.b16 %v854, %v852
    %887 = vmatprep.subr.bf16.mxu0 %v870
    %888 = vmatpush1.bf16.msra.mxu0 %v869
    %889 = vmatprep.subr.bf16.mxu0 %v868
    %890 = vmatpush1.bf16.msra.mxu0 %v867
    %891 = vmatprep.subr.bf16.mxu0 %v866
    %892 = vmatpush1.bf16.msra.mxu0 %v865
    %893 = vmatprep.subr.bf16.mxu0 %v864
    %894 = vmatpush1.bf16.msra.mxu0 %v863
    %895 = vmatprep.subr.bf16.mxu0 %v862
    %896 = vmatpush1.bf16.msra.mxu0 %v861
    %897 = vmatprep.subr.bf16.mxu0 %v860
    %898 = vmatpush1.bf16.msra.mxu0 %v859
    %899 = vmatprep.subr.bf16.mxu0 %v858
    %900 = vmatpush1.bf16.msra.mxu0 %v857
    %901 = vmatprep.subr.bf16.mxu0 %v856
    %902 = vmatpush1.bf16.msra.mxu0 %v855
    %903 = vmatprep.subr.bf16.mxu0 0
    %904 = vmatpush2.bf16.msra.mxu0 0
    %905 = vmatprep.subr.bf16.mxu0 0
    %906 = vmatpush2.bf16.msra.mxu0 0
    %907 = vmatprep.subr.bf16.mxu0 0
    %908 = vmatpush2.bf16.msra.mxu0 0
    %909 = vmatprep.subr.bf16.mxu0 0
    %910 = vmatpush2.bf16.msra.mxu0 0
    %911 = vmatprep.subr.bf16.mxu0 0
    %912 = vmatpush2.bf16.msra.mxu0 0
    %913 = vmatprep.subr.bf16.mxu0 0
    %914 = vmatpush2.bf16.msra.mxu0 0
    %915 = vmatprep.subr.bf16.mxu0 0
    %916 = vmatpush2.bf16.msra.mxu0 0
    %917 = vmatprep.subr.bf16.mxu0 0
    %918 = vmatpush2.bf16.msra.mxu0 0
    %919 = vmatprep.mubr.bf16.mxu0 0
    %920 = vmatmul.mubr.bf16.gmra.mxu0 %v778
    %v921 = vpop.f32.mrf.mxu0
    %v922 = vadd.f32 %v800, %v921
    %v923 = vpop.f32.mrf.mxu0
    %v924 = vadd.f32 %v804, %v923
    %v925 = vpop.f32.mrf.mxu0
    %v926 = vpop.f32.mrf.mxu0
    %927 = vdwg.mxu0
    %v928 = vmul.f32 %v924, 0.5
    %v929 = vmul.f32 %v928, 1.442695
    %v930 = vpow.pop %v929
    %v931 = vld [vmem:[%s1] sm:$0xff]
    %v932 = vmul.f32 %v931, %v930
    %v933 = vadd.f32 %v922, %v932
    %v934 = vpack.c.bf16 %v933, %v933
    %v935 = vld [vmem:[%s6] sm:$0xf]
    %v936 = vld [vmem:[%s6 + $0x4] sm:$0xf]
    %v937 = vld [vmem:[%s6 + $0x8] sm:$0xf]
    %v938 = vld [vmem:[%s6 + $0xc] sm:$0xf]
    %v939 = vld [vmem:[%s6 + $0x10] sm:$0xf]
    %v940 = vld [vmem:[%s6 + $0x14] sm:$0xf]
    %v941 = vld [vmem:[%s6 + $0x18] sm:$0xf]
    %v942 = vld [vmem:[%s6 + $0x1c] sm:$0xf]
    %v943 = vld [vmem:[%s6 + $0x20] sm:$0xf]
    %v944 = vld [vmem:[%s6 + $0x24] sm:$0xf]
    %v945 = vld [vmem:[%s6 + $0x28] sm:$0xf]
    %v946 = vld [vmem:[%s6 + $0x2c] sm:$0xf]
    %v947 = vld [vmem:[%s6 + $0x30] sm:$0xf]
    %v948 = vld [vmem:[%s6 + $0x34] sm:$0xf]
    %v949 = vld [vmem:[%s6 + $0x38] sm:$0xf]
    %v950 = vld [vmem:[%s6 + $0x3c] sm:$0xf]
    %v951 = vld [vmem:[%s7] sm:$0x1]
    %v953 = vlaneseq
    %v954 = vshrl.u32 %v953, 7
    %v955 = vsub.s32 0, %v954
    %v956 = vrot.slane %v951, %v955
    %v974 = vunpack.c.l.b16 %v935
    %v975 = vunpack.c.l.b16 %v936
    %v976 = vunpack.c.l.b16 %v937
    %v977 = vunpack.c.l.b16 %v938
    %v978 = vunpack.c.l.b16 %v939
    %v979 = vunpack.c.l.b16 %v940
    %v980 = vunpack.c.l.b16 %v941
    %v981 = vunpack.c.l.b16 %v942
    %v982 = vunpack.c.l.b16 %v943
    %v983 = vunpack.c.l.b16 %v944
    %v984 = vunpack.c.l.b16 %v945
    %v985 = vunpack.c.l.b16 %v946
    %v986 = vunpack.c.l.b16 %v947
    %v987 = vunpack.c.l.b16 %v948
    %v988 = vunpack.c.l.b16 %v949
    %v989 = vunpack.c.l.b16 %v950
    %v990 = vpack.c.b16 %v975, %v974
    %v991 = vpack.c.b16 %v977, %v976
    %v992 = vpack.c.b16 %v979, %v978
    %v993 = vpack.c.b16 %v981, %v980
    %v994 = vpack.c.b16 %v983, %v982
    %v995 = vpack.c.b16 %v985, %v984
    %v996 = vpack.c.b16 %v987, %v986
    %v997 = vpack.c.b16 %v989, %v988
    %1006 = vmatprep.subr.bf16.mxu0 0
    %1007 = vmatpush1.bf16.msra.mxu0 %v997
    %1008 = vmatprep.subr.bf16.mxu0 0
    %1009 = vmatpush1.bf16.msra.mxu0 %v996
    %1010 = vmatprep.subr.bf16.mxu0 0
    %1011 = vmatpush1.bf16.msra.mxu0 %v995
    %1012 = vmatprep.subr.bf16.mxu0 0
    %1013 = vmatpush1.bf16.msra.mxu0 %v994
    %1014 = vmatprep.subr.bf16.mxu0 0
    %1015 = vmatpush1.bf16.msra.mxu0 %v993
    %1016 = vmatprep.subr.bf16.mxu0 0
    %1017 = vmatpush1.bf16.msra.mxu0 %v992
    %1018 = vmatprep.subr.bf16.mxu0 0
    %1019 = vmatpush1.bf16.msra.mxu0 %v991
    %1020 = vmatprep.subr.bf16.mxu0 0
    %1021 = vmatpush1.bf16.msra.mxu0 %v990
    %1022 = vmatprep.subr.bf16.mxu0 0
    %1023 = vmatpush2.bf16.msra.mxu0 0
    %1024 = vmatprep.subr.bf16.mxu0 0
    %1025 = vmatpush2.bf16.msra.mxu0 0
    %1026 = vmatprep.subr.bf16.mxu0 0
    %1027 = vmatpush2.bf16.msra.mxu0 0
    %1028 = vmatprep.subr.bf16.mxu0 0
    %1029 = vmatpush2.bf16.msra.mxu0 0
    %1030 = vmatprep.subr.bf16.mxu0 0
    %1031 = vmatpush2.bf16.msra.mxu0 0
    %1032 = vmatprep.subr.bf16.mxu0 0
    %1033 = vmatpush2.bf16.msra.mxu0 0
    %1034 = vmatprep.subr.bf16.mxu0 0
    %1035 = vmatpush2.bf16.msra.mxu0 0
    %1036 = vmatprep.subr.bf16.mxu0 0
    %1037 = vmatpush2.bf16.msra.mxu0 0
    %1038 = vmatprep.mubr.bf16.mxu0 0
    %1039 = vmatmul.mubr.bf16.gmra.mxu0 %v934
    %v1040 = vpop.f32.mrf.mxu0
    %v1041 = vadd.f32 %v956, %v1040
    %v1042 = vpop.f32.mrf.mxu0
    %v1043 = vpop.f32.mrf.mxu0
    %v1044 = vpop.f32.mrf.mxu0
    %1045 = vdwg.mxu0
    %v1046 = vmax.f32 %v1041, 0.0
    %v1047 = vpack.c.bf16 %v1046, %v1046
    %v1048 = vld [vmem:[#allocation4] sm:$0xff]
    %v1049 = vld [vmem:[#allocation4 + $0x8] sm:$0xff]
    %v1050 = vld [vmem:[#allocation4 + $0x10] sm:$0xff]
    %v1051 = vld [vmem:[#allocation4 + $0x18] sm:$0xff]
    %v1052 = vld [vmem:[#allocation4 + $0x20] sm:$0xff]
    %v1053 = vld [vmem:[#allocation4 + $0x28] sm:$0xff]
    %v1054 = vld [vmem:[#allocation4 + $0x30] sm:$0xff]
    %v1055 = vld [vmem:[#allocation4 + $0x38] sm:$0xff]
    %v1056 = vld [vmem:[#allocation4 + $0x40] sm:$0xff]
    %v1057 = vld [vmem:[#allocation4 + $0x48] sm:$0xff]
    %v1058 = vld [vmem:[#allocation4 + $0x50] sm:$0xff]
    %v1059 = vld [vmem:[#allocation4 + $0x58] sm:$0xff]
    %v1060 = vld [vmem:[#allocation4 + $0x60] sm:$0xff]
    %v1061 = vld [vmem:[#allocation4 + $0x68] sm:$0xff]
    %v1062 = vld [vmem:[#allocation4 + $0x70] sm:$0xff]
    %v1063 = vld [vmem:[#allocation4 + $0x78] sm:$0xff]
    %v1064 = vld [vmem:[#allocation4 + $0x80] sm:$0xff]
    %v1065 = vld [vmem:[#allocation4 + $0x88] sm:$0xff]
    %v1066 = vld [vmem:[#allocation4 + $0x90] sm:$0xff]
    %v1067 = vld [vmem:[#allocation4 + $0x98] sm:$0xff]
    %v1068 = vld [vmem:[#allocation4 + $0xa0] sm:$0xff]
    %v1069 = vld [vmem:[#allocation4 + $0xa8] sm:$0xff]
    %v1070 = vld [vmem:[#allocation4 + $0xb0] sm:$0xff]
    %v1071 = vld [vmem:[#allocation4 + $0xb8] sm:$0xff]
    %v1072 = vld [vmem:[#allocation4 + $0xc0] sm:$0xff]
    %v1073 = vld [vmem:[#allocation4 + $0xc8] sm:$0xff]
    %v1074 = vld [vmem:[#allocation4 + $0xd0] sm:$0xff]
    %v1075 = vld [vmem:[#allocation4 + $0xd8] sm:$0xff]
    %v1076 = vld [vmem:[#allocation4 + $0xe0] sm:$0xff]
    %v1077 = vld [vmem:[#allocation4 + $0xe8] sm:$0xff]
    %v1078 = vld [vmem:[#allocation4 + $0xf0] sm:$0xff]
    %v1079 = vld [vmem:[#allocation4 + $0xf8] sm:$0xff]
    %v1080 = vld [vmem:[#allocation4 + $0x100] sm:$0xff]
    %v1081 = vld [vmem:[#allocation4 + $0x108] sm:$0xff]
    %v1082 = vld [vmem:[#allocation4 + $0x110] sm:$0xff]
    %v1083 = vld [vmem:[#allocation4 + $0x118] sm:$0xff]
    %v1084 = vld [vmem:[#allocation4 + $0x120] sm:$0xff]
    %v1085 = vld [vmem:[#allocation4 + $0x128] sm:$0xff]
    %v1086 = vld [vmem:[#allocation4 + $0x130] sm:$0xff]
    %v1087 = vld [vmem:[#allocation4 + $0x138] sm:$0xff]
    %v1088 = vld [vmem:[#allocation4 + $0x140] sm:$0xff]
    %v1089 = vld [vmem:[#allocation4 + $0x148] sm:$0xff]
    %v1090 = vld [vmem:[#allocation4 + $0x150] sm:$0xff]
    %v1091 = vld [vmem:[#allocation4 + $0x158] sm:$0xff]
    %v1092 = vld [vmem:[#allocation4 + $0x160] sm:$0xff]
    %v1093 = vld [vmem:[#allocation4 + $0x168] sm:$0xff]
    %v1094 = vld [vmem:[#allocation4 + $0x170] sm:$0xff]
    %v1095 = vld [vmem:[#allocation4 + $0x178] sm:$0xff]
    %v1096 = vld [vmem:[#allocation4 + $0x180] sm:$0xff]
    %v1097 = vld [vmem:[#allocation4 + $0x188] sm:$0xff]
    %v1098 = vld [vmem:[#allocation4 + $0x190] sm:$0xff]
    %v1099 = vld [vmem:[#allocation4 + $0x198] sm:$0xff]
    %v1100 = vld [vmem:[#allocation4 + $0x1a0] sm:$0xff]
    %v1101 = vld [vmem:[#allocation4 + $0x1a8] sm:$0xff]
    %v1102 = vld [vmem:[#allocation4 + $0x1b0] sm:$0xff]
    %v1103 = vld [vmem:[#allocation4 + $0x1b8] sm:$0xff]
    %v1104 = vld [vmem:[#allocation4 + $0x1c0] sm:$0xff]
    %v1105 = vld [vmem:[#allocation4 + $0x1c8] sm:$0xff]
    %v1106 = vld [vmem:[#allocation4 + $0x1d0] sm:$0xff]
    %v1107 = vld [vmem:[#allocation4 + $0x1d8] sm:$0xff]
    %v1108 = vld [vmem:[#allocation4 + $0x1e0] sm:$0xff]
    %v1109 = vld [vmem:[#allocation4 + $0x1e8] sm:$0xff]
    %v1110 = vld [vmem:[#allocation4 + $0x1f0] sm:$0xff]
    %v1111 = vld [vmem:[#allocation4 + $0x1f8] sm:$0xff]
    %v1112 = vld [vmem:[%s9] sm:$0xff]
    %v1114 = vlaneseq
    %v1115 = vshrl.u32 %v1114, 7
    %v1116 = vsub.s32 0, %v1115
    %v1117 = vrot.slane %v1112, %v1116
    %v1118 = vlaneseq
    %v1119 = vshrl.u32 %v1118, 7
    %v1120 = vsub.s32 1, %v1119
    %v1121 = vrot.slane %v1112, %v1120
    %v1122 = vlaneseq
    %v1123 = vshrl.u32 %v1122, 7
    %v1124 = vsub.s32 2, %v1123
    %v1125 = vrot.slane %v1112, %v1124
    %v1126 = vlaneseq
    %v1127 = vshrl.u32 %v1126, 7
    %v1128 = vsub.s32 3, %v1127
    %v1129 = vrot.slane %v1112, %v1128
    %v1130 = vlaneseq
    %v1131 = vshrl.u32 %v1130, 7
    %v1132 = vsub.s32 4, %v1131
    %v1133 = vrot.slane %v1112, %v1132
    %v1134 = vlaneseq
    %v1135 = vshrl.u32 %v1134, 7
    %v1136 = vsub.s32 5, %v1135
    %v1137 = vrot.slane %v1112, %v1136
    %v1138 = vlaneseq
    %v1139 = vshrl.u32 %v1138, 7
    %v1140 = vsub.s32 6, %v1139
    %v1141 = vrot.slane %v1112, %v1140
    %v1142 = vlaneseq
    %v1143 = vshrl.u32 %v1142, 7
    %v1144 = vsub.s32 7, %v1143
    %v1145 = vrot.slane %v1112, %v1144
    %v1218 = vunpack.c.l.b16 %v1048
    %v1219 = vunpack.c.h.b16 %v1048
    %v1220 = vunpack.c.l.b16 %v1049
    %v1221 = vunpack.c.h.b16 %v1049
    %v1222 = vunpack.c.l.b16 %v1050
    %v1223 = vunpack.c.h.b16 %v1050
    %v1224 = vunpack.c.l.b16 %v1051
    %v1225 = vunpack.c.h.b16 %v1051
    %v1226 = vunpack.c.l.b16 %v1052
    %v1227 = vunpack.c.h.b16 %v1052
    %v1228 = vunpack.c.l.b16 %v1053
    %v1229 = vunpack.c.h.b16 %v1053
    %v1230 = vunpack.c.l.b16 %v1054
    %v1231 = vunpack.c.h.b16 %v1054
    %v1232 = vunpack.c.l.b16 %v1055
    %v1233 = vunpack.c.h.b16 %v1055
    %v1234 = vunpack.c.l.b16 %v1056
    %v1235 = vunpack.c.h.b16 %v1056
    %v1236 = vunpack.c.l.b16 %v1057
    %v1237 = vunpack.c.h.b16 %v1057
    %v1238 = vunpack.c.l.b16 %v1058
    %v1239 = vunpack.c.h.b16 %v1058
    %v1240 = vunpack.c.l.b16 %v1059
    %v1241 = vunpack.c.h.b16 %v1059
    %v1242 = vunpack.c.l.b16 %v1060
    %v1243 = vunpack.c.h.b16 %v1060
    %v1244 = vunpack.c.l.b16 %v1061
    %v1245 = vunpack.c.h.b16 %v1061
    %v1246 = vunpack.c.l.b16 %v1062
    %v1247 = vunpack.c.h.b16 %v1062
    %v1248 = vunpack.c.l.b16 %v1063
    %v1249 = vunpack.c.h.b16 %v1063
    %v1250 = vunpack.c.l.b16 %v1064
    %v1251 = vunpack.c.h.b16 %v1064
    %v1252 = vunpack.c.l.b16 %v1065
    %v1253 = vunpack.c.h.b16 %v1065
    %v1254 = vunpack.c.l.b16 %v1066
    %v1255 = vunpack.c.h.b16 %v1066
    %v1256 = vunpack.c.l.b16 %v1067
    %v1257 = vunpack.c.h.b16 %v1067
    %v1258 = vunpack.c.l.b16 %v1068
    %v1259 = vunpack.c.h.b16 %v1068
    %v1260 = vunpack.c.l.b16 %v1069
    %v1261 = vunpack.c.h.b16 %v1069
    %v1262 = vunpack.c.l.b16 %v1070
    %v1263 = vunpack.c.h.b16 %v1070
    %v1264 = vunpack.c.l.b16 %v1071
    %v1265 = vunpack.c.h.b16 %v1071
    %v1266 = vunpack.c.l.b16 %v1072
    %v1267 = vunpack.c.h.b16 %v1072
    %v1268 = vunpack.c.l.b16 %v1073
    %v1269 = vunpack.c.h.b16 %v1073
    %v1270 = vunpack.c.l.b16 %v1074
    %v1271 = vunpack.c.h.b16 %v1074
    %v1272 = vunpack.c.l.b16 %v1075
    %v1273 = vunpack.c.h.b16 %v1075
    %v1274 = vunpack.c.l.b16 %v1076
    %v1275 = vunpack.c.h.b16 %v1076
    %v1276 = vunpack.c.l.b16 %v1077
    %v1277 = vunpack.c.h.b16 %v1077
    %v1278 = vunpack.c.l.b16 %v1078
    %v1279 = vunpack.c.h.b16 %v1078
    %v1280 = vunpack.c.l.b16 %v1079
    %v1281 = vunpack.c.h.b16 %v1079
    %v1282 = vunpack.c.l.b16 %v1080
    %v1283 = vunpack.c.h.b16 %v1080
    %v1284 = vunpack.c.l.b16 %v1081
    %v1285 = vunpack.c.h.b16 %v1081
    %v1286 = vunpack.c.l.b16 %v1082
    %v1287 = vunpack.c.h.b16 %v1082
    %v1288 = vunpack.c.l.b16 %v1083
    %v1289 = vunpack.c.h.b16 %v1083
    %v1290 = vunpack.c.l.b16 %v1084
    %v1291 = vunpack.c.h.b16 %v1084
    %v1292 = vunpack.c.l.b16 %v1085
    %v1293 = vunpack.c.h.b16 %v1085
    %v1294 = vunpack.c.l.b16 %v1086
    %v1295 = vunpack.c.h.b16 %v1086
    %v1296 = vunpack.c.l.b16 %v1087
    %v1297 = vunpack.c.h.b16 %v1087
    %v1298 = vunpack.c.l.b16 %v1088
    %v1299 = vunpack.c.h.b16 %v1088
    %v1300 = vunpack.c.l.b16 %v1089
    %v1301 = vunpack.c.h.b16 %v1089
    %v1302 = vunpack.c.l.b16 %v1090
    %v1303 = vunpack.c.h.b16 %v1090
    %v1304 = vunpack.c.l.b16 %v1091
    %v1305 = vunpack.c.h.b16 %v1091
    %v1306 = vunpack.c.l.b16 %v1092
    %v1307 = vunpack.c.h.b16 %v1092
    %v1308 = vunpack.c.l.b16 %v1093
    %v1309 = vunpack.c.h.b16 %v1093
    %v1310 = vunpack.c.l.b16 %v1094
    %v1311 = vunpack.c.h.b16 %v1094
    %v1312 = vunpack.c.l.b16 %v1095
    %v1313 = vunpack.c.h.b16 %v1095
    %v1314 = vunpack.c.l.b16 %v1096
    %v1315 = vunpack.c.h.b16 %v1096
    %v1316 = vunpack.c.l.b16 %v1097
    %v1317 = vunpack.c.h.b16 %v1097
    %v1318 = vunpack.c.l.b16 %v1098
    %v1319 = vunpack.c.h.b16 %v1098
    %v1320 = vunpack.c.l.b16 %v1099
    %v1321 = vunpack.c.h.b16 %v1099
    %v1322 = vunpack.c.l.b16 %v1100
    %v1323 = vunpack.c.h.b16 %v1100
    %v1324 = vunpack.c.l.b16 %v1101
    %v1325 = vunpack.c.h.b16 %v1101
    %v1326 = vunpack.c.l.b16 %v1102
    %v1327 = vunpack.c.h.b16 %v1102
    %v1328 = vunpack.c.l.b16 %v1103
    %v1329 = vunpack.c.h.b16 %v1103
    %v1330 = vunpack.c.l.b16 %v1104
    %v1331 = vunpack.c.h.b16 %v1104
    %v1332 = vunpack.c.l.b16 %v1105
    %v1333 = vunpack.c.h.b16 %v1105
    %v1334 = vunpack.c.l.b16 %v1106
    %v1335 = vunpack.c.h.b16 %v1106
    %v1336 = vunpack.c.l.b16 %v1107
    %v1337 = vunpack.c.h.b16 %v1107
    %v1338 = vunpack.c.l.b16 %v1108
    %v1339 = vunpack.c.h.b16 %v1108
    %v1340 = vunpack.c.l.b16 %v1109
    %v1341 = vunpack.c.h.b16 %v1109
    %v1342 = vunpack.c.l.b16 %v1110
    %v1343 = vunpack.c.h.b16 %v1110
    %v1344 = vunpack.c.l.b16 %v1111
    %v1345 = vunpack.c.h.b16 %v1111
    %v1346 = vpack.c.b16 %v1226, %v1218
    %v1347 = vpack.c.b16 %v1227, %v1219
    %v1348 = vpack.c.b16 %v1228, %v1220
    %v1349 = vpack.c.b16 %v1229, %v1221
    %v1350 = vpack.c.b16 %v1230, %v1222
    %v1351 = vpack.c.b16 %v1231, %v1223
    %v1352 = vpack.c.b16 %v1232, %v1224
    %v1353 = vpack.c.b16 %v1233, %v1225
    %v1354 = vpack.c.b16 %v1242, %v1234
    %v1355 = vpack.c.b16 %v1243, %v1235
    %v1356 = vpack.c.b16 %v1244, %v1236
    %v1357 = vpack.c.b16 %v1245, %v1237
    %v1358 = vpack.c.b16 %v1246, %v1238
    %v1359 = vpack.c.b16 %v1247, %v1239
    %v1360 = vpack.c.b16 %v1248, %v1240
    %v1361 = vpack.c.b16 %v1249, %v1241
    %v1362 = vpack.c.b16 %v1258, %v1250
    %v1363 = vpack.c.b16 %v1259, %v1251
    %v1364 = vpack.c.b16 %v1260, %v1252
    %v1365 = vpack.c.b16 %v1261, %v1253
    %v1366 = vpack.c.b16 %v1262, %v1254
    %v1367 = vpack.c.b16 %v1263, %v1255
    %v1368 = vpack.c.b16 %v1264, %v1256
    %v1369 = vpack.c.b16 %v1265, %v1257
    %v1370 = vpack.c.b16 %v1274, %v1266
    %v1371 = vpack.c.b16 %v1275, %v1267
    %v1372 = vpack.c.b16 %v1276, %v1268
    %v1373 = vpack.c.b16 %v1277, %v1269
    %v1374 = vpack.c.b16 %v1278, %v1270
    %v1375 = vpack.c.b16 %v1279, %v1271
    %v1376 = vpack.c.b16 %v1280, %v1272
    %v1377 = vpack.c.b16 %v1281, %v1273
    %v1378 = vpack.c.b16 %v1290, %v1282
    %v1379 = vpack.c.b16 %v1291, %v1283
    %v1380 = vpack.c.b16 %v1292, %v1284
    %v1381 = vpack.c.b16 %v1293, %v1285
    %v1382 = vpack.c.b16 %v1294, %v1286
    %v1383 = vpack.c.b16 %v1295, %v1287
    %v1384 = vpack.c.b16 %v1296, %v1288
    %v1385 = vpack.c.b16 %v1297, %v1289
    %v1386 = vpack.c.b16 %v1306, %v1298
    %v1387 = vpack.c.b16 %v1307, %v1299
    %v1388 = vpack.c.b16 %v1308, %v1300
    %v1389 = vpack.c.b16 %v1309, %v1301
    %v1390 = vpack.c.b16 %v1310, %v1302
    %v1391 = vpack.c.b16 %v1311, %v1303
    %v1392 = vpack.c.b16 %v1312, %v1304
    %v1393 = vpack.c.b16 %v1313, %v1305
    %v1394 = vpack.c.b16 %v1322, %v1314
    %v1395 = vpack.c.b16 %v1323, %v1315
    %v1396 = vpack.c.b16 %v1324, %v1316
    %v1397 = vpack.c.b16 %v1325, %v1317
    %v1398 = vpack.c.b16 %v1326, %v1318
    %v1399 = vpack.c.b16 %v1327, %v1319
    %v1400 = vpack.c.b16 %v1328, %v1320
    %v1401 = vpack.c.b16 %v1329, %v1321
    %v1402 = vpack.c.b16 %v1338, %v1330
    %v1403 = vpack.c.b16 %v1339, %v1331
    %v1404 = vpack.c.b16 %v1340, %v1332
    %v1405 = vpack.c.b16 %v1341, %v1333
    %v1406 = vpack.c.b16 %v1342, %v1334
    %v1407 = vpack.c.b16 %v1343, %v1335
    %v1408 = vpack.c.b16 %v1344, %v1336
    %v1409 = vpack.c.b16 %v1345, %v1337
    %1474 = vmatprep.subr.bf16.mxu0 %v1403
    %1475 = vmatpush1.bf16.msra.mxu0 %v1402
    %1476 = vmatprep.subr.bf16.mxu0 %v1395
    %1477 = vmatpush1.bf16.msra.mxu0 %v1394
    %1478 = vmatprep.subr.bf16.mxu0 %v1387
    %1479 = vmatpush1.bf16.msra.mxu0 %v1386
    %1480 = vmatprep.subr.bf16.mxu0 %v1379
    %1481 = vmatpush1.bf16.msra.mxu0 %v1378
    %1482 = vmatprep.subr.bf16.mxu0 %v1371
    %1483 = vmatpush1.bf16.msra.mxu0 %v1370
    %1484 = vmatprep.subr.bf16.mxu0 %v1363
    %1485 = vmatpush1.bf16.msra.mxu0 %v1362
    %1486 = vmatprep.subr.bf16.mxu0 %v1355
    %1487 = vmatpush1.bf16.msra.mxu0 %v1354
    %1488 = vmatprep.subr.bf16.mxu0 %v1347
    %1489 = vmatpush1.bf16.msra.mxu0 %v1346
    %1490 = vmatprep.subr.bf16.mxu0 0
    %1491 = vmatpush2.bf16.msra.mxu0 0
    %1492 = vmatprep.subr.bf16.mxu0 0
    %1493 = vmatpush2.bf16.msra.mxu0 0
    %1494 = vmatprep.subr.bf16.mxu0 0
    %1495 = vmatpush2.bf16.msra.mxu0 0
    %1496 = vmatprep.subr.bf16.mxu0 0
    %1497 = vmatpush2.bf16.msra.mxu0 0
    %1498 = vmatprep.subr.bf16.mxu0 0
    %1499 = vmatpush2.bf16.msra.mxu0 0
    %1500 = vmatprep.subr.bf16.mxu0 0
    %1501 = vmatpush2.bf16.msra.mxu0 0
    %1502 = vmatprep.subr.bf16.mxu0 0
    %1503 = vmatpush2.bf16.msra.mxu0 0
    %1504 = vmatprep.subr.bf16.mxu0 0
    %1505 = vmatpush2.bf16.msra.mxu0 0
    %1506 = vmatprep.mubr.bf16.mxu0 0
    %1507 = vmatmul.mubr.bf16.gmra.mxu0 %v1047
    %v1508 = vpop.f32.mrf.mxu0
    %v1509 = vadd.f32 %v1117, %v1508
    %v1510 = vpop.f32.mrf.mxu0
    %v1511 = vadd.f32 %v1121, %v1510
    %v1512 = vpop.f32.mrf.mxu0
    %v1513 = vpop.f32.mrf.mxu0
    %1514 = vdwg.mxu0
    %1515 = vmatprep.subr.bf16.mxu0 %v1405
    %1516 = vmatpush1.bf16.msra.mxu0 %v1404
    %1517 = vmatprep.subr.bf16.mxu0 %v1397
    %1518 = vmatpush1.bf16.msra.mxu0 %v1396
    %1519 = vmatprep.subr.bf16.mxu0 %v1389
    %1520 = vmatpush1.bf16.msra.mxu0 %v1388
    %1521 = vmatprep.subr.bf16.mxu0 %v1381
    %1522 = vmatpush1.bf16.msra.mxu0 %v1380
    %1523 = vmatprep.subr.bf16.mxu0 %v1373
    %1524 = vmatpush1.bf16.msra.mxu0 %v1372
    %1525 = vmatprep.subr.bf16.mxu0 %v1365
    %1526 = vmatpush1.bf16.msra.mxu0 %v1364
    %1527 = vmatprep.subr.bf16.mxu0 %v1357
    %1528 = vmatpush1.bf16.msra.mxu0 %v1356
    %1529 = vmatprep.subr.bf16.mxu0 %v1349
    %1530 = vmatpush1.bf16.msra.mxu0 %v1348
    %1531 = vmatprep.subr.bf16.mxu0 0
    %1532 = vmatpush2.bf16.msra.mxu0 0
    %1533 = vmatprep.subr.bf16.mxu0 0
    %1534 = vmatpush2.bf16.msra.mxu0 0
    %1535 = vmatprep.subr.bf16.mxu0 0
    %1536 = vmatpush2.bf16.msra.mxu0 0
    %1537 = vmatprep.subr.bf16.mxu0 0
    %1538 = vmatpush2.bf16.msra.mxu0 0
    %1539 = vmatprep.subr.bf16.mxu0 0
    %1540 = vmatpush2.bf16.msra.mxu0 0
    %1541 = vmatprep.subr.bf16.mxu0 0
    %1542 = vmatpush2.bf16.msra.mxu0 0
    %1543 = vmatprep.subr.bf16.mxu0 0
    %1544 = vmatpush2.bf16.msra.mxu0 0
    %1545 = vmatprep.subr.bf16.mxu0 0
    %1546 = vmatpush2.bf16.msra.mxu0 0
    %1547 = vmatprep.mubr.bf16.mxu0 0
    %1548 = vmatmul.mubr.bf16.gmra.mxu0 %v1047
    %v1549 = vpop.f32.mrf.mxu0
    %v1550 = vadd.f32 %v1125, %v1549
    %v1551 = vpop.f32.mrf.mxu0
    %v1552 = vadd.f32 %v1129, %v1551
    %v1553 = vpop.f32.mrf.mxu0
    %v1554 = vpop.f32.mrf.mxu0
    %1555 = vdwg.mxu0
    %1556 = vmatprep.subr.bf16.mxu0 %v1407
    %1557 = vmatpush1.bf16.msra.mxu0 %v1406
    %1558 = vmatprep.subr.bf16.mxu0 %v1399
    %1559 = vmatpush1.bf16.msra.mxu0 %v1398
    %1560 = vmatprep.subr.bf16.mxu0 %v1391
    %1561 = vmatpush1.bf16.msra.mxu0 %v1390
    %1562 = vmatprep.subr.bf16.mxu0 %v1383
    %1563 = vmatpush1.bf16.msra.mxu0 %v1382
    %1564 = vmatprep.subr.bf16.mxu0 %v1375
    %1565 = vmatpush1.bf16.msra.mxu0 %v1374
    %1566 = vmatprep.subr.bf16.mxu0 %v1367
    %1567 = vmatpush1.bf16.msra.mxu0 %v1366
    %1568 = vmatprep.subr.bf16.mxu0 %v1359
    %1569 = vmatpush1.bf16.msra.mxu0 %v1358
    %1570 = vmatprep.subr.bf16.mxu0 %v1351
    %1571 = vmatpush1.bf16.msra.mxu0 %v1350
    %1572 = vmatprep.subr.bf16.mxu0 0
    %1573 = vmatpush2.bf16.msra.mxu0 0
    %1574 = vmatprep.subr.bf16.mxu0 0
    %1575 = vmatpush2.bf16.msra.mxu0 0
    %1576 = vmatprep.subr.bf16.mxu0 0
    %1577 = vmatpush2.bf16.msra.mxu0 0
    %1578 = vmatprep.subr.bf16.mxu0 0
    %1579 = vmatpush2.bf16.msra.mxu0 0
    %1580 = vmatprep.subr.bf16.mxu0 0
    %1581 = vmatpush2.bf16.msra.mxu0 0
    %1582 = vmatprep.subr.bf16.mxu0 0
    %1583 = vmatpush2.bf16.msra.mxu0 0
    %1584 = vmatprep.subr.bf16.mxu0 0
    %1585 = vmatpush2.bf16.msra.mxu0 0
    %1586 = vmatprep.subr.bf16.mxu0 0
    %1587 = vmatpush2.bf16.msra.mxu0 0
    %1588 = vmatprep.mubr.bf16.mxu0 0
    %1589 = vmatmul.mubr.bf16.gmra.mxu0 %v1047
    %v1590 = vpop.f32.mrf.mxu0
    %v1591 = vadd.f32 %v1133, %v1590
    %v1592 = vpop.f32.mrf.mxu0
    %v1593 = vadd.f32 %v1137, %v1592
    %v1594 = vpop.f32.mrf.mxu0
    %v1595 = vpop.f32.mrf.mxu0
    %1596 = vdwg.mxu0
    %1597 = vmatprep.subr.bf16.mxu0 %v1409
    %1598 = vmatpush1.bf16.msra.mxu0 %v1408
    %1599 = vmatprep.subr.bf16.mxu0 %v1401
    %1600 = vmatpush1.bf16.msra.mxu0 %v1400
    %1601 = vmatprep.subr.bf16.mxu0 %v1393
    %1602 = vmatpush1.bf16.msra.mxu0 %v1392
    %1603 = vmatprep.subr.bf16.mxu0 %v1385
    %1604 = vmatpush1.bf16.msra.mxu0 %v1384
    %1605 = vmatprep.subr.bf16.mxu0 %v1377
    %1606 = vmatpush1.bf16.msra.mxu0 %v1376
    %1607 = vmatprep.subr.bf16.mxu0 %v1369
    %1608 = vmatpush1.bf16.msra.mxu0 %v1368
    %1609 = vmatprep.subr.bf16.mxu0 %v1361
    %1610 = vmatpush1.bf16.msra.mxu0 %v1360
    %1611 = vmatprep.subr.bf16.mxu0 %v1353
    %1612 = vmatpush1.bf16.msra.mxu0 %v1352
    %1613 = vmatprep.subr.bf16.mxu0 0
    %1614 = vmatpush2.bf16.msra.mxu0 0
    %1615 = vmatprep.subr.bf16.mxu0 0
    %1616 = vmatpush2.bf16.msra.mxu0 0
    %1617 = vmatprep.subr.bf16.mxu0 0
    %1618 = vmatpush2.bf16.msra.mxu0 0
    %1619 = vmatprep.subr.bf16.mxu0 0
    %1620 = vmatpush2.bf16.msra.mxu0 0
    %1621 = vmatprep.subr.bf16.mxu0 0
    %1622 = vmatpush2.bf16.msra.mxu0 0
    %1623 = vmatprep.subr.bf16.mxu0 0
    %1624 = vmatpush2.bf16.msra.mxu0 0
    %1625 = vmatprep.subr.bf16.mxu0 0
    %1626 = vmatpush2.bf16.msra.mxu0 0
    %1627 = vmatprep.subr.bf16.mxu0 0
    %1628 = vmatpush2.bf16.msra.mxu0 0
    %1629 = vmatprep.mubr.bf16.mxu0 0
    %1630 = vmatmul.mubr.bf16.gmra.mxu0 %v1047
    %v1631 = vpop.f32.mrf.mxu0
    %v1632 = vadd.f32 %v1141, %v1631
    %v1633 = vpop.f32.mrf.mxu0
    %v1634 = vadd.f32 %v1145, %v1633
    %v1635 = vpop.f32.mrf.mxu0
    %v1636 = vpop.f32.mrf.mxu0
    %1637 = vdwg.mxu0
    %v1638 = vpack.c.bf16 %v1509, %v1509
    %v1639 = vpack.c.bf16 %v1511, %v1511
    %v1640 = vpack.c.bf16 %v1550, %v1550
    %v1641 = vpack.c.bf16 %v1552, %v1552
    %v1642 = vpack.c.bf16 %v1591, %v1591
    %v1643 = vpack.c.bf16 %v1593, %v1593
    %v1644 = vpack.c.bf16 %v1632, %v1632
    %v1645 = vpack.c.bf16 %v1634, %v1634
    %v1654 = vunpack.c.l.b16 %v1638
    %v1655 = vunpack.c.l.b16 %v1639
    %v1656 = vunpack.c.l.b16 %v1640
    %v1657 = vunpack.c.l.b16 %v1641
    %v1658 = vunpack.c.l.b16 %v1642
    %v1659 = vunpack.c.l.b16 %v1643
    %v1660 = vunpack.c.l.b16 %v1644
    %v1661 = vunpack.c.l.b16 %v1645
    %v1662 = vpack.c.b16 %v1655, %v1654
    %v1663 = vpack.c.b16 %v1657, %v1656
    %v1664 = vpack.c.b16 %v1659, %v1658
    %v1665 = vpack.c.b16 %v1661, %v1660
    %1670 = vst [vmem:[%s10] sm:$0xff] %v1662
    %1671 = vst [vmem:[%s10 + $0x8] sm:$0xff] %v1663
    %1672 = vst [vmem:[%s10 + $0x10] sm:$0xff] %v1664
    %1673 = vst [vmem:[%s10 + $0x18] sm:$0xff] %v1665
    %1674 = vst [vmem:[%s11] sm:$0xff] %v922
    %1675 = vst [vmem:[%s11 + $0x8] sm:$0xff] %v924
    %1676 = vst [vmem:[%s11 + $0x10] sm:$0xff] %v933
    %1677 = vst [vmem:[%s11 + $0x18] sm:$0xff] %v930
    // Predicated region
    $region50: #{vae_forward.1} parent=1 // pred_check
      _
    $region51: #{vae_forward.1} parent=1 // pred_check_branch
      %1679 = sbr.rel (0) target = $region53
    $region52: #{vae_forward.1} parent=1 // pred_region
      _
    $region53: #{vae_forward.1} parent=1 // pred_fallthru
      _
    // Predicated region
    $region54: #{vae_forward.1} parent=1 // pred_check
      _
    $region55: #{vae_forward.1} parent=1 // pred_check_branch
      %1681 = sbr.rel (0) target = $region57
    $region56: #{vae_forward.1} parent=1 // pred_region
      _
    $region57: #{vae_forward.1} parent=1 // pred_fallthru
      _
    // Predicated region
    $region58: #{vae_forward.1} parent=1 // pred_check
      _
    $region59: #{vae_forward.1} parent=1 // pred_check_branch
      %1683 = sbr.rel (0) target = $region61
    $region60: #{vae_forward.1} parent=1 // pred_region
      _
    $region61: #{vae_forward.1} parent=1 // pred_fallthru
      _
    // Predicated region
    $region62: #{vae_forward.1} parent=1 // pred_check
      _
    $region63: #{vae_forward.1} parent=1 // pred_check_branch
      %1685 = sbr.rel (0) target = $region65
    $region64: #{vae_forward.1} parent=1 // pred_region
      _
    $region65: #{vae_forward.1} parent=1 // pred_fallthru
      _
    %1686 = vsyncpa [#allocation3], 1
    %1687 = vsyncpa [#allocation5], 1

</llo_original>
